<compile_context>
chip_gen: v7x
topology: tpu7x:2x2x1
jax: 0.10.0
libtpu: 0.0.40
codegen_flags: <defaults>
</compile_context>

<pallas_src>
import math

import numpy as np
import jax
import jax.numpy as jnp
from jax.experimental import pallas as pl
from jax.experimental.pallas import tpu as pltpu

_LN_EPS = 1e-5
_GELU_C = math.sqrt(2.0 / math.pi)


def _gelu_tanh(x):
    # TODO(synk): PyTorch nn.GELU() defaults to the exact erf form; the tanh
    # approximation is used here (kernel AND reference) since erf lowering
    # through Mosaic is not guaranteed.
    return 0.5 * x * (1.0 + jnp.tanh(_GELU_C * (x + 0.044715 * x * x * x)))


def _layernorm(y, gamma, beta):
    mu = jnp.mean(y, axis=-1, keepdims=True)
    var = jnp.mean((y - mu) ** 2, axis=-1, keepdims=True)
    return (y - mu) * jax.lax.rsqrt(var + _LN_EPS) * gamma + beta


def _round_up(x, m):
    return (x + m - 1) // m * m


def _choose_tile(n_rows, tile):
    rows8 = _round_up(max(int(n_rows), 1), 8)
    tile = max(8, min(_round_up(int(tile), 8), rows8))
    # Keep >= 2 grid steps when possible so the "parallel" axis can shard
    # across v7x's 2 TensorCores (harmless on 1-TC v5e/v6e).
    if tile == rows8 and rows8 >= 16:
        tile = _round_up((rows8 + 1) // 2, 8)
    return tile


def _pad_rows(x, rows):
    pad = rows - x.shape[0]
    if pad == 0:
        return x
    return jnp.concatenate(
        [x, jnp.zeros((pad,) + x.shape[1:], x.dtype)], axis=0)


def _scatter_mean(src, idx, num_receivers):
    summed = jax.ops.segment_sum(src, idx, num_segments=num_receivers)
    count = jax.ops.segment_sum(
        jnp.ones((src.shape[0],), src.dtype), idx, num_segments=num_receivers)
    return summed / jnp.maximum(count, 1.0)[:, None]


# ----------------------------------------------------------------------------
# Pallas kernels
# ----------------------------------------------------------------------------
def _message_kernel(hrc_ref, d_ref, w_ref, wd_ref, p_ref, out_ref):
    # messages = LayerNorm(GELU([h_row|h_col] @ Wrc + dist*wd + b)) * g + be
    # Single K=2D dot -> full systolic depth on the 256-deep v6e/v7x MXUs.
    y = jnp.dot(hrc_ref[...], w_ref[...], preferred_element_type=jnp.float32)
    y = y + d_ref[...] * wd_ref[...]          # (tile,1)*(1,D) VPU outer prod
    y = y + p_ref[0:1, :]                     # bias
    y = _gelu_tanh(y)
    out_ref[...] = _layernorm(y, p_ref[1:2, :], p_ref[2:3, :])


def _update_kernel(h_ref, m_ref, c_ref, wh_ref, wm_ref, p_ref, out_ref):
    # out = h + LayerNorm(h@Wh + (agg_sum*inv_count)@Wm + b) * g + be
    # scatter_mean normalization folded in; residual fused; elementwise math
    # in f32, only MXU operands are cast to the weight dtype (bf16 option).
    w_h = wh_ref[...]
    w_m = wm_ref[...]
    h = h_ref[...]                            # f32, reused for the residual
    m = m_ref[...] * c_ref[...]               # mean = raw sum * 1/max(deg,1)
    y = jnp.dot(h.astype(w_h.dtype), w_h, preferred_element_type=jnp.float32)
    y = y + jnp.dot(m.astype(w_m.dtype), w_m,
                    preferred_element_type=jnp.float32)
    y = y + p_ref[0:1, :]
    out_ref[...] = h + _layernorm(y, p_ref[1:2, :], p_ref[2:3, :])


def _message_pass(hrc, dist, w_rc, w_d, pvec, *, tile, n_valid):
    Ep, K = hrc.shape
    D = w_rc.shape[1]
    ib = hrc.dtype.itemsize
    flops = 2 * Ep * K * D + 16 * Ep * D
    bytes_accessed = (Ep * K * ib + 4 * Ep * (D + 1)
                      + K * D * w_rc.dtype.itemsize + 4 * 4 * D)
    out = pl.pallas_call(
        _message_kernel,
        out_shape=jax.ShapeDtypeStruct((Ep, D), jnp.float32),
        grid_spec=pltpu.PrefetchScalarGridSpec(
            num_scalar_prefetch=0,
            grid=(Ep // tile,),
            in_specs=[
                pl.BlockSpec((tile, K), lambda i: (i, 0)),
                pl.BlockSpec((tile, 1), lambda i: (i, 0)),
                pl.BlockSpec((K, D), lambda i: (0, 0)),
                pl.BlockSpec((1, D), lambda i: (0, 0)),
                pl.BlockSpec((3, D), lambda i: (0, 0)),
            ],
            out_specs=pl.BlockSpec((tile, D), lambda i: (i, 0)),
        ),
        compiler_params=pltpu.CompilerParams(
            dimension_semantics=("parallel",)),
        cost_estimate=pl.CostEstimate(flops=int(flops),
                                      transcendentals=int(Ep * D),
                                      bytes_accessed=int(bytes_accessed)),
    )(hrc, dist, w_rc, w_d, pvec)
    return out[:n_valid]


def _update_pass(h, agg_sum, inv_count, w_h, w_m, pvec, *, tile, n_valid):
    Np, D = h.shape
    wb = w_h.dtype.itemsize
    flops = 4 * Np * D * D + 16 * Np * D
    bytes_accessed = 4 * Np * (3 * D + 1) + 2 * D * D * wb + 4 * 3 * D
    out = pl.pallas_call(
        _update_kernel,
        out_shape=jax.ShapeDtypeStruct((Np, D), jnp.float32),
        grid_spec=pltpu.PrefetchScalarGridSpec(
            num_scalar_prefetch=0,
            grid=(Np // tile,),
            in_specs=[
                pl.BlockSpec((tile, D), lambda i: (i, 0)),
                pl.BlockSpec((tile, D), lambda i: (i, 0)),
                pl.BlockSpec((tile, 1), lambda i: (i, 0)),
                pl.BlockSpec((D, D), lambda i: (0, 0)),
                pl.BlockSpec((D, D), lambda i: (0, 0)),
                pl.BlockSpec((3, D), lambda i: (0, 0)),
            ],
            out_specs=pl.BlockSpec((tile, D), lambda i: (i, 0)),
        ),
        compiler_params=pltpu.CompilerParams(
            dimension_semantics=("parallel",)),
        cost_estimate=pl.CostEstimate(flops=int(flops), transcendentals=0,
                                      bytes_accessed=int(bytes_accessed)),
    )(h, agg_sum, inv_count, w_h, w_m, pvec)
    return out[:n_valid]


# ----------------------------------------------------------------------------
# InvMPNN forward (Pallas path)
# ----------------------------------------------------------------------------
def inv_mpnn_forward(scalar_features, cartesian_pos, edge_index, params, *,
                     mp_steps, tile_e=1024, tile_n=1024,
                     matmul_dtype=jnp.float32, compute_all_steps=False):
    if mp_steps == 0:
        return scalar_features
    row, col = edge_index[0], edge_index[1]
    N = cartesian_pos.shape[0]
    diff = cartesian_pos[row] - cartesian_pos[col]
    dist = jnp.sqrt(jnp.sum(diff * diff, axis=-1, keepdims=True))  # (E, 1)

    h_s = scalar_features
    if h_s is None:
        # initial_proj (Linear(1, D)) on edge distances + scatter_mean (XLA).
        h0 = dist @ params['w_ip'].T + params['b_ip']
        h_s = _scatter_mean(h0, col, N)
    h_s = h_s.astype(jnp.float32)
    D = h_s.shape[1]
    E = row.shape[0]

    # ---- loop-invariant work, hoisted (h_s never changes inside the loop) --
    # Receiver degree; its reciprocal is folded into the update kernel so
    # only a raw segment_sum remains per step in XLA.
    count = jax.ops.segment_sum(jnp.ones((E,), jnp.float32), col,
                                num_segments=N)
    inv_count = (1.0 / jnp.maximum(count, 1.0))[:, None]
    # Endpoint gather, pre-concatenated -> one full-depth K=2D MXU operand.
    hrc = jnp.concatenate([jnp.take(h_s, row, axis=0),
                           jnp.take(h_s, col, axis=0)], axis=-1)

    te = _choose_tile(E, tile_e)
    tn = _choose_tile(N, tile_n)
    Ep = _round_up(E, te)
    Np = _round_up(N, tn)
    hrc_p = _pad_rows(hrc.astype(matmul_dtype), Ep)
    dist_p = _pad_rows(dist.astype(jnp.float32), Ep)
    h_p = _pad_rows(h_s, Np)
    inv_p = _pad_rows(inv_count, Np)

    def one_step(p):
        W1, W2 = p['W1'], p['W2']
        w_rc = W1[:, :2 * D].T.astype(matmul_dtype)        # (2D, D)
        w_d = W1[:, 2 * D:].T.astype(jnp.float32)          # (1, D)
        pm = jnp.stack([p['b1'], p['g1'], p['be1']]).astype(jnp.float32)
        messages = _message_pass(hrc_p, dist_p, w_rc, w_d, pm,
                                 tile=te, n_valid=E)
        agg_sum = jax.ops.segment_sum(messages, col, num_segments=N)
        agg_p = _pad_rows(agg_sum, Np)
        w_h = W2[:, :D].T.astype(matmul_dtype)
        w_m = W2[:, D:].T.astype(matmul_dtype)
        pu = jnp.stack([p['b2'], p['g2'], p['be2']]).astype(jnp.float32)
        return _update_pass(h_p, agg_p, inv_p, w_h, w_m, pu,
                            tile=tn, n_valid=N)

    if compute_all_steps:
        out = None
        for step in range(mp_steps):
            out = one_step(params['steps'][step])
        return out
    # h_s is constant inside the module's loop and only the last step's
    # h_s_update reaches the output, so earlier steps are dead compute;
    # running only the final step is bit-identical to the full loop.
    # TODO(synk): confirm whether the PyTorch module intended h_s to be
    # carried across steps; if so, loop with updated h_s and re-gathering.
    return one_step(params['steps'][mp_steps - 1])


# ----------------------------------------------------------------------------
# Parameters (deterministic synthetic init, mirrors the nn.Module layout)
# ----------------------------------------------------------------------------
def init_params(key, D, mp_steps):
    keys = jax.random.split(key, 2 + mp_steps)
    params = dict(
        w_ip=jax.random.normal(keys[0], (D, 1), jnp.float32),
        b_ip=jax.random.normal(keys[1], (D,), jnp.float32) * 0.1,
        steps=[],
    )
    for s in range(mp_steps):
        k = jax.random.split(keys[2 + s], 8)
        params['steps'].append(dict(
            W1=jax.random.normal(k[0], (D, 2 * D + 1), jnp.float32)
            / math.sqrt(2 * D + 1),
            b1=jax.random.normal(k[1], (D,), jnp.float32) * 0.1,
            g1=1.0 + 0.1 * jax.random.normal(k[2], (D,), jnp.float32),
            be1=0.1 * jax.random.normal(k[3], (D,), jnp.float32),
            W2=jax.random.normal(k[4], (D, 2 * D), jnp.float32)
            / math.sqrt(2 * D),
            b2=jax.random.normal(k[5], (D,), jnp.float32) * 0.1,
            g2=1.0 + 0.1 * jax.random.normal(k[6], (D,), jnp.float32),
            be2=0.1 * jax.random.normal(k[7], (D,), jnp.float32),
        ))
    return params


# ----------------------------------------------------------------------------
# Pure-JAX reference (literal transcription of the PyTorch forward)
# ----------------------------------------------------------------------------
def reference(scalar_features, cartesian_pos, edge_index, params, mp_steps):
    if mp_steps == 0:
        return scalar_features
    row, col = edge_index[0], edge_index[1]
    N = cartesian_pos.shape[0]
    dist = jnp.linalg.norm(cartesian_pos[row] - cartesian_pos[col], axis=-1,
                           keepdims=True)
    h_s = scalar_features
    if h_s is None:
        h0 = dist @ params['w_ip'].T + params['b_ip']
        h_s = _scatter_mean(h0, col, N)
    h_s = h_s.astype(jnp.float32)
    hp = jax.lax.Precision.HIGHEST
    h_s_update = None
    for step in range(mp_steps):
        p = params['steps'][step]
        msg_in = jnp.concatenate([h_s[row], h_s[col], dist], axis=-1)
        y = jnp.dot(msg_in, p['W1'].T, precision=hp) + p['b1']
        y = _gelu_tanh(y)
        y = _layernorm(y, p['g1'], p['be1'])
        agg = _scatter_mean(y, col, N)
        upd_in = jnp.concatenate([h_s, agg], axis=-1)
        z = jnp.dot(upd_in, p['W2'].T, precision=hp) + p['b2']
        h_s_update = _layernorm(z, p['g2'], p['be2'])
    return h_s + h_s_update


if __name__ == "__main__":
    key = jax.random.PRNGKey(0)
    N = 256        # nodes
    E = 1024       # edges
    D = 128        # scalar_feature_dim (lane-dense)
    mp_steps = 2

    k1, k2, k3, k4, kp = jax.random.split(key, 5)
    pos = jax.random.normal(k1, (N, 3), jnp.float32)
    h_s = jax.random.normal(k2, (N, D), jnp.float32)
    row = jax.random.randint(k3, (E,), 0, N, dtype=jnp.int32)
    col = jax.random.randint(k4, (E,), 0, N, dtype=jnp.int32)
    edge_index = jnp.stack([row, col], axis=0)
    params = init_params(kp, D, mp_steps)

    ref = reference(h_s, pos, edge_index, params, mp_steps)

    # Path 1: scalar_features provided, f32 MXU operands.
    out = inv_mpnn_forward(h_s, pos, edge_index, params, mp_steps=mp_steps)
    jax.block_until_ready(out)
    np.testing.assert_allclose(np.asarray(out), np.asarray(ref),
                               rtol=2e-3, atol=2e-3)

    # Literal full-loop path (dead earlier steps included) matches exactly.
    out_all = inv_mpnn_forward(h_s, pos, edge_index, params,
                               mp_steps=mp_steps, compute_all_steps=True)
    jax.block_until_ready(out_all)
    np.testing.assert_allclose(np.asarray(out_all), np.asarray(out),
                               rtol=1e-6, atol=1e-6)

    # bf16 MXU-operand fast path (v6e/v7x); elementwise math stays f32.
    out_bf16 = inv_mpnn_forward(h_s, pos, edge_index, params,
                                mp_steps=mp_steps,
                                matmul_dtype=jnp.bfloat16)
    jax.block_until_ready(out_bf16)
    np.testing.assert_allclose(np.asarray(out_bf16), np.asarray(ref),
                               rtol=1e-1, atol=1e-1)

    # Path 2: scalar_features is None (initial_proj branch).
    out2 = inv_mpnn_forward(None, pos, edge_index, params, mp_steps=mp_steps)
    jax.block_until_ready(out2)
    ref2 = reference(None, pos, edge_index, params, mp_steps)
    np.testing.assert_allclose(np.asarray(out2), np.asarray(ref2),
                               rtol=2e-3, atol=2e-3)

    print("KERNEL_OK")
</pallas_src>

<mosaic_0001>
module attributes {stable_mosaic.version = 11 : i64} {
  func.func @_message_kernel(%arg0: i32, %arg1: memref<512x256xf32, #tpu.memory_space<vmem>>, %arg2: memref<512x1xf32, #tpu.memory_space<vmem>>, %arg3: memref<256x128xf32, #tpu.memory_space<vmem>>, %arg4: memref<1x128xf32, #tpu.memory_space<vmem>>, %arg5: memref<3x128xf32, #tpu.memory_space<vmem>>, %arg6: memref<512x128xf32, #tpu.memory_space<vmem>>) attributes {dimension_semantics = [#tpu.dimension_semantics<parallel>], iteration_bounds = array<i64: 2>, scalar_prefetch = 0 : i64, scratch_operands = 0 : i64, tpu.core_type = #tpu.core_type<tc>, window_params = [{transform_indices = @transform_0, window_bounds = array<i64: 512, 256>}, {transform_indices = @transform_1, window_bounds = array<i64: 512, 1>}, {pipeline_mode = #tpu.pipeline_mode<synchronous>, transform_indices = @transform_2, window_bounds = array<i64: 256, 128>}, {pipeline_mode = #tpu.pipeline_mode<synchronous>, transform_indices = @transform_3, window_bounds = array<i64: 1, 128>}, {pipeline_mode = #tpu.pipeline_mode<synchronous>, transform_indices = @transform_4, window_bounds = array<i64: 3, 128>}, {transform_indices = @transform_5, window_bounds = array<i64: 512, 128>}]} {
    %c0 = arith.constant 0 : index
    %c0_0 = arith.constant 0 : index
    %0 = vector.load %arg1[%c0, %c0_0] : memref<512x256xf32, #tpu.memory_space<vmem>>, vector<512x256xf32>
    %c0_1 = arith.constant 0 : index
    %c0_2 = arith.constant 0 : index
    %1 = vector.load %arg3[%c0_1, %c0_2] : memref<256x128xf32, #tpu.memory_space<vmem>>, vector<256x128xf32>
    %cst = arith.constant dense<0.000000e+00> : vector<512x128xf32>
    %2 = tpu.matmul %0, %1, %cst {dimension_numbers = #tpu.dot_dimension_numbers<[1], [0], [0], [1], [0, 0, 1, 1], [], []>} : vector<512x256xf32>, vector<256x128xf32>, vector<512x128xf32> -> vector<512x128xf32>
    %c0_3 = arith.constant 0 : index
    %c0_4 = arith.constant 0 : index
    %3 = vector.load %arg2[%c0_3, %c0_4] : memref<512x1xf32, #tpu.memory_space<vmem>>, vector<512x1xf32>
    %c0_5 = arith.constant 0 : index
    %c0_6 = arith.constant 0 : index
    %4 = vector.load %arg4[%c0_5, %c0_6] : memref<1x128xf32, #tpu.memory_space<vmem>>, vector<1x128xf32>
    %5 = vector.broadcast %3 : vector<512x1xf32> to vector<512x128xf32>
    %6 = vector.broadcast %4 : vector<1x128xf32> to vector<512x128xf32>
    %7 = arith.mulf %5, %6 : vector<512x128xf32>
    %8 = arith.addf %2, %7 : vector<512x128xf32>
    %c0_7 = arith.constant 0 : index
    %c0_8 = arith.constant 0 : index
    %9 = vector.load %arg5[%c0_7, %c0_8] : memref<3x128xf32, #tpu.memory_space<vmem>>, vector<1x128xf32>
    %10 = vector.broadcast %9 : vector<1x128xf32> to vector<512x128xf32>
    %11 = arith.addf %8, %10 : vector<512x128xf32>
    %cst_9 = arith.constant 5.000000e-01 : f32
    %12 = vector.broadcast %cst_9 : f32 to vector<512x128xf32>
    %13 = arith.mulf %12, %11 : vector<512x128xf32>
    %cst_10 = arith.constant 4.471500e-02 : f32
    %14 = vector.broadcast %cst_10 : f32 to vector<512x128xf32>
    %15 = arith.mulf %14, %11 : vector<512x128xf32>
    %16 = arith.mulf %15, %11 : vector<512x128xf32>
    %17 = arith.mulf %16, %11 : vector<512x128xf32>
    %18 = arith.addf %11, %17 : vector<512x128xf32>
    %cst_11 = arith.constant 0.797884583 : f32
    %19 = vector.broadcast %cst_11 : f32 to vector<512x128xf32>
    %20 = arith.mulf %19, %18 : vector<512x128xf32>
    %21 = math.tanh %20 : vector<512x128xf32>
    %cst_12 = arith.constant 1.000000e+00 : f32
    %22 = vector.broadcast %cst_12 : f32 to vector<512x128xf32>
    %23 = arith.addf %22, %21 : vector<512x128xf32>
    %24 = arith.mulf %13, %23 : vector<512x128xf32>
    %c1 = arith.constant 1 : index
    %c0_13 = arith.constant 0 : index
    %25 = vector.load %arg5[%c1, %c0_13] : memref<3x128xf32, #tpu.memory_space<vmem>>, vector<1x128xf32>
    %c2 = arith.constant 2 : index
    %c0_14 = arith.constant 0 : index
    %26 = vector.load %arg5[%c2, %c0_14] : memref<3x128xf32, #tpu.memory_space<vmem>>, vector<1x128xf32>
    %cst_15 = arith.constant dense<0.000000e+00> : vector<512xf32>
    %27 = vector.multi_reduction <add>, %24, %cst_15 [1] : vector<512x128xf32> to vector<512xf32>
    %28 = vector.shape_cast %27 : vector<512xf32> to vector<512x1xf32>
    %cst_16 = arith.constant 1.280000e+02 : f32
    %29 = vector.broadcast %cst_16 : f32 to vector<512x1xf32>
    %30 = arith.divf %28, %29 : vector<512x1xf32>
    %31 = vector.broadcast %30 : vector<512x1xf32> to vector<512x128xf32>
    %32 = arith.subf %24, %31 : vector<512x128xf32>
    %33 = arith.mulf %32, %32 : vector<512x128xf32>
    %cst_17 = arith.constant dense<0.000000e+00> : vector<512xf32>
    %34 = vector.multi_reduction <add>, %33, %cst_17 [1] : vector<512x128xf32> to vector<512xf32>
    %35 = vector.shape_cast %34 : vector<512xf32> to vector<512x1xf32>
    %cst_18 = arith.constant 1.280000e+02 : f32
    %36 = vector.broadcast %cst_18 : f32 to vector<512x1xf32>
    %37 = arith.divf %35, %36 : vector<512x1xf32>
    %38 = vector.broadcast %30 : vector<512x1xf32> to vector<512x128xf32>
    %39 = arith.subf %24, %38 : vector<512x128xf32>
    %cst_19 = arith.constant 9.99999974E-6 : f32
    %40 = vector.broadcast %cst_19 : f32 to vector<512x1xf32>
    %41 = arith.addf %37, %40 : vector<512x1xf32>
    %42 = math.rsqrt %41 : vector<512x1xf32>
    %43 = vector.broadcast %42 : vector<512x1xf32> to vector<512x128xf32>
    %44 = arith.mulf %39, %43 : vector<512x128xf32>
    %45 = vector.broadcast %25 : vector<1x128xf32> to vector<512x128xf32>
    %46 = arith.mulf %44, %45 : vector<512x128xf32>
    %47 = vector.broadcast %26 : vector<1x128xf32> to vector<512x128xf32>
    %48 = arith.addf %46, %47 : vector<512x128xf32>
    %c0_20 = arith.constant 0 : index
    %c0_21 = arith.constant 0 : index
    %49 = vector.load %arg6[%c0_20, %c0_21] : memref<512x128xf32, #tpu.memory_space<vmem>>, vector<512x128xf32>
    tpu.vector_store %arg6[%c0_20, %c0_21], %48 {strides = array<i32>} : memref<512x128xf32, #tpu.memory_space<vmem>>, vector<512x128xf32>,
    return
  }
  func.func @transform_0(%arg0: i32) -> (i32, i32) {
    %c0_i32 = arith.constant 0 : i32
    %c0_i32_0 = arith.constant 0 : i32
    return %arg0, %c0_i32 : i32, i32
  }
  func.func @transform_1(%arg0: i32) -> (i32, i32) {
    %c0_i32 = arith.constant 0 : i32
    %c0_i32_0 = arith.constant 0 : i32
    return %arg0, %c0_i32 : i32, i32
  }
  func.func @transform_2(%arg0: i32) -> (i32, i32) {
    %c0_i32 = arith.constant 0 : i32
    %c0_i32_0 = arith.constant 0 : i32
    %c0_i32_1 = arith.constant 0 : i32
    return %c0_i32, %c0_i32_0 : i32, i32
  }
  func.func @transform_3(%arg0: i32) -> (i32, i32) {
    %c0_i32 = arith.constant 0 : i32
    %c0_i32_0 = arith.constant 0 : i32
    %c0_i32_1 = arith.constant 0 : i32
    return %c0_i32, %c0_i32_0 : i32, i32
  }
  func.func @transform_4(%arg0: i32) -> (i32, i32) {
    %c0_i32 = arith.constant 0 : i32
    %c0_i32_0 = arith.constant 0 : i32
    %c0_i32_1 = arith.constant 0 : i32
    return %c0_i32, %c0_i32_0 : i32, i32
  }
  func.func @transform_5(%arg0: i32) -> (i32, i32) {
    %c0_i32 = arith.constant 0 : i32
    %c0_i32_0 = arith.constant 0 : i32
    return %arg0, %c0_i32 : i32, i32
  }
}

</mosaic_0001>

<llo_original>
// kernel: tpu_custom_call.1
$region0: #{tpu_custom_call.1}
  #allocation0 [shape = 'u32[]', space=smem, size = 0x4, offset = 0x4, fixed_abs, tag = 'smem constant byte address 0x4 - core index']
  #allocation1 [shape = 'u32[144,128]{1,0:T(1,128)}', space=vmem, size = 0x12000, scoped, tag = 'internal scratch']
  %s0 = inlined_call_operand.hbm [shape: f32[1024,256], index: 0, kind: input, shape index: {}]
  %s1 = inlined_call_operand.vmem [shape: f32[1024,1], index: 1, kind: input, shape index: {}]
  %s2 = inlined_call_operand.vmem [shape: f32[256,128], index: 2, kind: input, shape index: {}]
  %s3 = inlined_call_operand.vmem [shape: f32[1,128], index: 3, kind: input, shape index: {}]
  %s4 = inlined_call_operand.vmem [shape: f32[3,128], index: 4, kind: input, shape index: {}]
  %s5 = inlined_call_operand.hbm [shape: f32[1024,128], index: 5, kind: output, shape index: {}]
  %s6 = sld [smem:[#allocation0]]
  $region57: #{tpu_custom_call.1} parent=0
    _
  %s8 = ssub.s32 1, %s6
  %s9 = scalar_select 0, %s8, %s6
  $region1: #{tpu_custom_call.1} parent=0
    #allocation2 [shape = 'u8[1048576]{0}', space=vmem, size = 0x100000, scoped, tag = 'input window, operand 0']
    #allocation3 [shape = 's32[2]{0}', space=sflag, size = 0x8, scoped, tag = 'scoped memory for tpu_custom_call.1']
    #allocation4 [shape = 's32[2]{0}', space=sflag, size = 0x8, scoped, tag = 'scoped memory for tpu_custom_call.1']
    #allocation5 [shape = 'u8[524288]{0}', space=vmem, size = 0x80000, scoped, tag = 'output window, operand 0']
    %10 = vsyncpa [#allocation3], 0
    %s11 = scalar_lea.sflag [#allocation3], 1
    %12 = vsyncpa %s11, 0
    %13 = vsyncpa [#allocation4], 0
    %s14 = scalar_lea.sflag [#allocation4], 1
    %15 = vsyncpa %s14, 0
    loop: start=0, step=1, limit=4
    $region2: #{tpu_custom_call.1} parent=1 // loop_pre_header
      _
    $region3: #{tpu_custom_call.1} parent=1 // loop_header
      %s17 = sphi 0, %s21
      %p18 = scmp.ge.s32.totalorder %s17, 4
      %s27 = sphi 0, %s29
      %s30 = sphi 0, %s27
      %s31 = sphi 0, %s30
      %s47 = sphi 0, %s31
      %s53 = sphi 0, %s55
      %s56 = sphi 0, %s53
      %s57 = sphi 0, %s56
      %s73 = sphi 0, %s57
      %s77 = sphi 0, %s77
      %s79 = sphi 0, %s77
      %s80 = sphi 0, %s79
      %s94 = sphi 0, %s80
      %s98 = sphi 0, %s98
      %s100 = sphi 0, %s98
      %s101 = sphi 0, %s100
      %s115 = sphi 0, %s101
      %s119 = sphi 0, %s119
      %s121 = sphi 0, %s119
      %s122 = sphi 0, %s121
      %s136 = sphi 0, %s122
      %s142 = sphi 0, %s144
      %s145 = sphi 0, %s142
      %s146 = sphi 0, %s145
      %s162 = sphi 0, %s146
    $region4: #{tpu_custom_call.1} parent=1 // loop_header_branch
      %20 = sbr.rel (%p18) target = $region8
    $region5: #{tpu_custom_call.1} parent=1 // loop_body
      %s22 = ssub.s32 %s17, 1
      %s23 = ssub.s32 %s17, 2
      %s24 = sadd.s32 %s17, 1
      %s25 = ssub.s32 %s17, %s24
      %p26 = scmp.eq.s32.totalorder %s25, 0
      %s28 = sadd.s32 %s27, 1
      %s29 = scalar_select %p26, %s27, %s28
      %p32 = pneg %p26
      %p33 = scmp.eq.s32.totalorder %s17, 1
      %p34 = por %p32, %p33
      %p35 = scmp.ne.s32.totalorder %s27, %s30
      %p36 = scmp.eq.s32.totalorder %s17, 0
      %p37 = por %p35, %p36
      %p38 = scmp.ne.s32.totalorder %s27, %s30
      %p39 = scmp.eq.s32.totalorder %s22, 1
      %p40 = por %p38, %p39
      %p41 = scmp.ne.s32.totalorder %s30, %s31
      %p42 = scmp.eq.s32.totalorder %s22, 0
      %p43 = por %p41, %p42
      %p44 = scmp.ne.s32.totalorder %s30, %s31
      %p45 = scmp.eq.s32.totalorder %s23, 1
      %p46 = por %p44, %p45
      %p48 = scmp.ne.s32.totalorder %s31, %s47
      %p49 = scmp.eq.s32.totalorder %s23, 0
      %p50 = por %p48, %p49
      %s51 = ssub.s32 %s17, %s24
      %p52 = scmp.eq.s32.totalorder %s51, 0
      %s54 = sadd.s32 %s53, 1
      %s55 = scalar_select %p52, %s53, %s54
      %p58 = pneg %p52
      %p59 = scmp.eq.s32.totalorder %s17, 1
      %p60 = por %p58, %p59
      %p61 = scmp.ne.s32.totalorder %s53, %s56
      %p62 = scmp.eq.s32.totalorder %s17, 0
      %p63 = por %p61, %p62
      %p64 = scmp.ne.s32.totalorder %s53, %s56
      %p65 = scmp.eq.s32.totalorder %s22, 1
      %p66 = por %p64, %p65
      %p67 = scmp.ne.s32.totalorder %s56, %s57
      %p68 = scmp.eq.s32.totalorder %s22, 0
      %p69 = por %p67, %p68
      %p70 = scmp.ne.s32.totalorder %s56, %s57
      %p71 = scmp.eq.s32.totalorder %s23, 1
      %p72 = por %p70, %p71
      %p74 = scmp.ne.s32.totalorder %s57, %s73
      %p75 = scmp.eq.s32.totalorder %s23, 0
      %p76 = por %p74, %p75
      %s78 = sadd.s32 %s77, 1
      %p81 = scmp.eq.s32.totalorder %s17, 1
      %p82 = scmp.ne.s32.totalorder %s77, %s79
      %p83 = scmp.eq.s32.totalorder %s17, 0
      %p84 = por %p82, %p83
      %p85 = scmp.ne.s32.totalorder %s77, %s79
      %p86 = scmp.eq.s32.totalorder %s22, 1
      %p87 = por %p85, %p86
      %p88 = scmp.ne.s32.totalorder %s79, %s80
      %p89 = scmp.eq.s32.totalorder %s22, 0
      %p90 = por %p88, %p89
      %p91 = scmp.ne.s32.totalorder %s79, %s80
      %p92 = scmp.eq.s32.totalorder %s23, 1
      %p93 = por %p91, %p92
      %p95 = scmp.ne.s32.totalorder %s80, %s94
      %p96 = scmp.eq.s32.totalorder %s23, 0
      %p97 = por %p95, %p96
      %s99 = sadd.s32 %s98, 1
      %p102 = scmp.eq.s32.totalorder %s17, 1
      %p103 = scmp.ne.s32.totalorder %s98, %s100
      %p104 = scmp.eq.s32.totalorder %s17, 0
      %p105 = por %p103, %p104
      %p106 = scmp.ne.s32.totalorder %s98, %s100
      %p107 = scmp.eq.s32.totalorder %s22, 1
      %p108 = por %p106, %p107
      %p109 = scmp.ne.s32.totalorder %s100, %s101
      %p110 = scmp.eq.s32.totalorder %s22, 0
      %p111 = por %p109, %p110
      %p112 = scmp.ne.s32.totalorder %s100, %s101
      %p113 = scmp.eq.s32.totalorder %s23, 1
      %p114 = por %p112, %p113
      %p116 = scmp.ne.s32.totalorder %s101, %s115
      %p117 = scmp.eq.s32.totalorder %s23, 0
      %p118 = por %p116, %p117
      %s120 = sadd.s32 %s119, 1
      %p123 = scmp.eq.s32.totalorder %s17, 1
      %p124 = scmp.ne.s32.totalorder %s119, %s121
      %p125 = scmp.eq.s32.totalorder %s17, 0
      %p126 = por %p124, %p125
      %p127 = scmp.ne.s32.totalorder %s119, %s121
      %p128 = scmp.eq.s32.totalorder %s22, 1
      %p129 = por %p127, %p128
      %p130 = scmp.ne.s32.totalorder %s121, %s122
      %p131 = scmp.eq.s32.totalorder %s22, 0
      %p132 = por %p130, %p131
      %p133 = scmp.ne.s32.totalorder %s121, %s122
      %p134 = scmp.eq.s32.totalorder %s23, 1
      %p135 = por %p133, %p134
      %p137 = scmp.ne.s32.totalorder %s122, %s136
      %p138 = scmp.eq.s32.totalorder %s23, 0
      %p139 = por %p137, %p138
      %s140 = ssub.s32 %s17, %s24
      %p141 = scmp.eq.s32.totalorder %s140, 0
      %s143 = sadd.s32 %s142, 1
      %s144 = scalar_select %p141, %s142, %s143
      %p147 = pneg %p141
      %p148 = scmp.eq.s32.totalorder %s17, 1
      %p149 = por %p147, %p148
      %p150 = scmp.ne.s32.totalorder %s142, %s145
      %p151 = scmp.eq.s32.totalorder %s17, 0
      %p152 = por %p150, %p151
      %p153 = scmp.ne.s32.totalorder %s142, %s145
      %p154 = scmp.eq.s32.totalorder %s22, 1
      %p155 = por %p153, %p154
      %p156 = scmp.ne.s32.totalorder %s145, %s146
      %p157 = scmp.eq.s32.totalorder %s22, 0
      %p158 = por %p156, %p157
      %p159 = scmp.ne.s32.totalorder %s145, %s146
      %p160 = scmp.eq.s32.totalorder %s23, 1
      %p161 = por %p159, %p160
      %p163 = scmp.ne.s32.totalorder %s146, %s162
      %p164 = scmp.eq.s32.totalorder %s23, 0
      %p165 = por %p163, %p164
      %p166 = scmp.le.s32.totalorder 1, %s17
      %p167 = scmp.lt.s32.totalorder %s17, 3
      %p168 = pnand %p166, %p167
      %p169 = pneg %p168
      // Predicated region
      $region9: #{tpu_custom_call.1} parent=5 // pred_check
        _
      $region10: #{tpu_custom_call.1} parent=5 // pred_check_branch
        %171 = sbr.rel (%p168) target = $region12
      $region11: #{tpu_custom_call.1} parent=5 // pred_region
        %s172 = ssub.s32 %s17, 1
        // Predicated region
        $region13: #{tpu_custom_call.1} parent=11 // pred_check
          %p173 = pneg %p90
        $region14: #{tpu_custom_call.1} parent=11 // pred_check_branch
          %175 = sbr.rel (%p173) target = $region16
        $region15: #{tpu_custom_call.1} parent=11 // pred_region
          _
        $region16: #{tpu_custom_call.1} parent=11 // pred_fallthru
          _
        // Predicated region
        $region17: #{tpu_custom_call.1} parent=11 // pred_check
          %p176 = pneg %p111
        $region18: #{tpu_custom_call.1} parent=11 // pred_check_branch
          %178 = sbr.rel (%p176) target = $region20
        $region19: #{tpu_custom_call.1} parent=11 // pred_region
          _
        $region20: #{tpu_custom_call.1} parent=11 // pred_fallthru
          _
        // Predicated region
        $region21: #{tpu_custom_call.1} parent=11 // pred_check
          %p179 = pneg %p132
        $region22: #{tpu_custom_call.1} parent=11 // pred_check_branch
          %181 = sbr.rel (%p179) target = $region24
        $region23: #{tpu_custom_call.1} parent=11 // pred_region
          _
        $region24: #{tpu_custom_call.1} parent=11 // pred_fallthru
          _
      $region12: #{tpu_custom_call.1} parent=5 // pred_fallthru
        _
      %p182 = scmp.lt.s32.totalorder %s17, 2
      // Predicated region
      $region25: #{tpu_custom_call.1} parent=5 // pred_check
        %p183 = pneg %p182
      $region26: #{tpu_custom_call.1} parent=5 // pred_check_branch
        %185 = sbr.rel (%p183) target = $region28
      $region27: #{tpu_custom_call.1} parent=5 // pred_region
        // Predicated region
        $region29: #{tpu_custom_call.1} parent=27 // pred_check
          %p186 = pneg %p37
        $region30: #{tpu_custom_call.1} parent=27 // pred_check_branch
          %188 = sbr.rel (%p186) target = $region32
        $region31: #{tpu_custom_call.1} parent=27 // pred_region
          %s189 = sand.u32 %s27, 1
          %s190 = scalar_lea.sflag [#allocation3], %s189
          %s191 = sand.u32 %s27, 1
          %s192 = smul.addr %s191, 1024
          %s193 = scalar_lea.vmem [#allocation2], %s192
          %s194 = smul.u32 64, %s17
          %s196 = ssub.s32 16384, 16384
          %197 = vsyncadd %s190, %s196
          %s198 = smul.addr %s194, 2
          %s199 = smul.addr %s198, 128
          %s200 = scalar_lea.hbm %s0, %s199
          %s201 = sshll.u32 %s193, 4
          %s202 = int_to_ptr.vmem [resolvable:$true] %s201
          %207 = dma.hbm_to_vmem [thread:$0]  %s200, 16384, %s202, %s190, 256, 256, 16
        $region32: #{tpu_custom_call.1} parent=27 // pred_fallthru
          _
        // Predicated region
        $region33: #{tpu_custom_call.1} parent=27 // pred_check
          %p208 = pneg %p63
        $region34: #{tpu_custom_call.1} parent=27 // pred_check_branch
          %210 = sbr.rel (%p208) target = $region36
        $region35: #{tpu_custom_call.1} parent=27 // pred_region
          %s211 = smul.u32 64, %s17
          %p212 = scmp.lt.s32.totalorder %s211, 127
          %s213 = scalar_select %p212, %s211, 127
          %s214 = smul.addr %s213, 8
          %s215 = scalar_lea.vmem %s1, %s214
          %s216 = smul.u32 64, %s17
        $region36: #{tpu_custom_call.1} parent=27 // pred_fallthru
          _
      $region28: #{tpu_custom_call.1} parent=5 // pred_fallthru
        _
      %p217 = scmp.le.s32.totalorder 1, %s17
      %p218 = scmp.lt.s32.totalorder %s17, 3
      %p219 = pnand %p217, %p218
      %p220 = pneg %p219
      // Predicated region
      $region37: #{tpu_custom_call.1} parent=5 // pred_check
        _
      $region38: #{tpu_custom_call.1} parent=5 // pred_check_branch
        %222 = sbr.rel (%p219) target = $region40
      $region39: #{tpu_custom_call.1} parent=5 // pred_region
        %s223 = ssub.s32 %s17, 1
        %s224 = sand.u32 %s30, 1
        %s225 = scalar_lea.sflag [#allocation3], %s224
        %s226 = sand.u32 %s30, 1
        %s227 = smul.addr %s226, 1024
        %s228 = scalar_lea.vmem [#allocation2], %s227
        // Predicated region
        $region41: #{tpu_custom_call.1} parent=39 // pred_check
          %p229 = pneg %p43
        $region42: #{tpu_custom_call.1} parent=39 // pred_check_branch
          %231 = sbr.rel (%p229) target = $region44
        $region43: #{tpu_custom_call.1} parent=39 // pred_region
          %232 = dma.done %s225, 16384
        $region44: #{tpu_custom_call.1} parent=39 // pred_fallthru
          _
        %s233 = sand.u32 %s30, 1
        %s234 = scalar_lea.sflag [#allocation3], %s233
        %s235 = sand.u32 %s30, 1
        %s236 = smul.addr %s235, 1024
        %s237 = scalar_lea.vmem [#allocation2], %s236
        %p238 = pneg %p43
        %p239 = pneg %p40
        %s240 = smul.u32 64, %s22
        %p241 = scmp.lt.s32.totalorder %s240, 127
        %s242 = scalar_select %p241, %s240, 127
        %s243 = smul.addr %s242, 8
        %s244 = scalar_lea.vmem %s1, %s243
        %p245 = pneg %p69
        %p246 = pneg %p66
        %p247 = pneg %p90
        %p248 = pneg %p87
        %p249 = pneg %p111
        %p250 = pneg %p108
        %p251 = pneg %p132
        %p252 = pneg %p129
        %p253 = pneg %p158
        %p254 = pneg %p155
        %s255 = sand.u32 %s145, 1
        %s256 = scalar_lea.sflag [#allocation4], %s255
        %s257 = sand.u32 %s145, 1
        %s258 = smul.addr %s257, 512
        %s259 = scalar_lea.vmem [#allocation5], %s258
        %s260 = smul.u32 64, %s22
        %s261 = smul.u32 64, %s22
        %p262 = scmp.lt.s32.totalorder %s261, 127
        %s263 = scalar_select %p262, %s261, 127
        %s264 = smul.addr %s263, 8
        %s265 = scalar_lea.vmem %s1, %s264
        %s266 = smul.u32 64, %s22
        %s267 = smul.u32 64, %s22
        %v268 = vld [vmem:[%s228] sm:$0xff]
        %v269 = vld [vmem:[%s228 + $0x8] sm:$0xff]
        %v270 = vld [vmem:[%s228 + $0x10] sm:$0xff]
        %v271 = vld [vmem:[%s228 + $0x18] sm:$0xff]
        %v272 = vld [vmem:[%s228 + $0x20] sm:$0xff]
        %v273 = vld [vmem:[%s228 + $0x28] sm:$0xff]
        %v274 = vld [vmem:[%s228 + $0x30] sm:$0xff]
        %v275 = vld [vmem:[%s228 + $0x38] sm:$0xff]
        %v276 = vld [vmem:[%s228 + $0x40] sm:$0xff]
        %v277 = vld [vmem:[%s228 + $0x48] sm:$0xff]
        %v278 = vld [vmem:[%s228 + $0x50] sm:$0xff]
        %v279 = vld [vmem:[%s228 + $0x58] sm:$0xff]
        %v280 = vld [vmem:[%s228 + $0x60] sm:$0xff]
        %v281 = vld [vmem:[%s228 + $0x68] sm:$0xff]
        %v282 = vld [vmem:[%s228 + $0x70] sm:$0xff]
        %v283 = vld [vmem:[%s228 + $0x78] sm:$0xff]
        %v284 = vld [vmem:[%s228 + $0x80] sm:$0xff]
        %v285 = vld [vmem:[%s228 + $0x88] sm:$0xff]
        %v286 = vld [vmem:[%s228 + $0x90] sm:$0xff]
        %v287 = vld [vmem:[%s228 + $0x98] sm:$0xff]
        %v288 = vld [vmem:[%s228 + $0xa0] sm:$0xff]
        %v289 = vld [vmem:[%s228 + $0xa8] sm:$0xff]
        %v290 = vld [vmem:[%s228 + $0xb0] sm:$0xff]
        %v291 = vld [vmem:[%s228 + $0xb8] sm:$0xff]
        %v292 = vld [vmem:[%s228 + $0xc0] sm:$0xff]
        %v293 = vld [vmem:[%s228 + $0xc8] sm:$0xff]
        %v294 = vld [vmem:[%s228 + $0xd0] sm:$0xff]
        %v295 = vld [vmem:[%s228 + $0xd8] sm:$0xff]
        %v296 = vld [vmem:[%s228 + $0xe0] sm:$0xff]
        %v297 = vld [vmem:[%s228 + $0xe8] sm:$0xff]
        %v298 = vld [vmem:[%s228 + $0xf0] sm:$0xff]
        %v299 = vld [vmem:[%s228 + $0xf8] sm:$0xff]
        %v300 = vld [vmem:[%s228 + $0x100] sm:$0xff]
        %v301 = vld [vmem:[%s228 + $0x108] sm:$0xff]
        %v302 = vld [vmem:[%s228 + $0x110] sm:$0xff]
        %v303 = vld [vmem:[%s228 + $0x118] sm:$0xff]
        %v304 = vld [vmem:[%s228 + $0x120] sm:$0xff]
        %v305 = vld [vmem:[%s228 + $0x128] sm:$0xff]
        %v306 = vld [vmem:[%s228 + $0x130] sm:$0xff]
        %v307 = vld [vmem:[%s228 + $0x138] sm:$0xff]
        %v308 = vld [vmem:[%s228 + $0x140] sm:$0xff]
        %v309 = vld [vmem:[%s228 + $0x148] sm:$0xff]
        %v310 = vld [vmem:[%s228 + $0x150] sm:$0xff]
        %v311 = vld [vmem:[%s228 + $0x158] sm:$0xff]
        %v312 = vld [vmem:[%s228 + $0x160] sm:$0xff]
        %v313 = vld [vmem:[%s228 + $0x168] sm:$0xff]
        %v314 = vld [vmem:[%s228 + $0x170] sm:$0xff]
        %v315 = vld [vmem:[%s228 + $0x178] sm:$0xff]
        %v316 = vld [vmem:[%s228 + $0x180] sm:$0xff]
        %v317 = vld [vmem:[%s228 + $0x188] sm:$0xff]
        %v318 = vld [vmem:[%s228 + $0x190] sm:$0xff]
        %v319 = vld [vmem:[%s228 + $0x198] sm:$0xff]
        %v320 = vld [vmem:[%s228 + $0x1a0] sm:$0xff]
        %v321 = vld [vmem:[%s228 + $0x1a8] sm:$0xff]
        %v322 = vld [vmem:[%s228 + $0x1b0] sm:$0xff]
        %v323 = vld [vmem:[%s228 + $0x1b8] sm:$0xff]
        %v324 = vld [vmem:[%s228 + $0x1c0] sm:$0xff]
        %v325 = vld [vmem:[%s228 + $0x1c8] sm:$0xff]
        %v326 = vld [vmem:[%s228 + $0x1d0] sm:$0xff]
        %v327 = vld [vmem:[%s228 + $0x1d8] sm:$0xff]
        %v328 = vld [vmem:[%s228 + $0x1e0] sm:$0xff]
        %v329 = vld [vmem:[%s228 + $0x1e8] sm:$0xff]
        %v330 = vld [vmem:[%s228 + $0x1f0] sm:$0xff]
        %v331 = vld [vmem:[%s228 + $0x1f8] sm:$0xff]
        %v332 = vld [vmem:[%s228 + $0x200] sm:$0xff]
        %v333 = vld [vmem:[%s228 + $0x208] sm:$0xff]
        %v334 = vld [vmem:[%s228 + $0x210] sm:$0xff]
        %v335 = vld [vmem:[%s228 + $0x218] sm:$0xff]
        %v336 = vld [vmem:[%s228 + $0x220] sm:$0xff]
        %v337 = vld [vmem:[%s228 + $0x228] sm:$0xff]
        %v338 = vld [vmem:[%s228 + $0x230] sm:$0xff]
        %v339 = vld [vmem:[%s228 + $0x238] sm:$0xff]
        %v340 = vld [vmem:[%s228 + $0x240] sm:$0xff]
        %v341 = vld [vmem:[%s228 + $0x248] sm:$0xff]
        %v342 = vld [vmem:[%s228 + $0x250] sm:$0xff]
        %v343 = vld [vmem:[%s228 + $0x258] sm:$0xff]
        %v344 = vld [vmem:[%s228 + $0x260] sm:$0xff]
        %v345 = vld [vmem:[%s228 + $0x268] sm:$0xff]
        %v346 = vld [vmem:[%s228 + $0x270] sm:$0xff]
        %v347 = vld [vmem:[%s228 + $0x278] sm:$0xff]
        %v348 = vld [vmem:[%s228 + $0x280] sm:$0xff]
        %v349 = vld [vmem:[%s228 + $0x288] sm:$0xff]
        %v350 = vld [vmem:[%s228 + $0x290] sm:$0xff]
        %v351 = vld [vmem:[%s228 + $0x298] sm:$0xff]
        %v352 = vld [vmem:[%s228 + $0x2a0] sm:$0xff]
        %v353 = vld [vmem:[%s228 + $0x2a8] sm:$0xff]
        %v354 = vld [vmem:[%s228 + $0x2b0] sm:$0xff]
        %v355 = vld [vmem:[%s228 + $0x2b8] sm:$0xff]
        %v356 = vld [vmem:[%s228 + $0x2c0] sm:$0xff]
        %v357 = vld [vmem:[%s228 + $0x2c8] sm:$0xff]
        %v358 = vld [vmem:[%s228 + $0x2d0] sm:$0xff]
        %v359 = vld [vmem:[%s228 + $0x2d8] sm:$0xff]
        %v360 = vld [vmem:[%s228 + $0x2e0] sm:$0xff]
        %v361 = vld [vmem:[%s228 + $0x2e8] sm:$0xff]
        %v362 = vld [vmem:[%s228 + $0x2f0] sm:$0xff]
        %v363 = vld [vmem:[%s228 + $0x2f8] sm:$0xff]
        %v364 = vld [vmem:[%s228 + $0x300] sm:$0xff]
        %v365 = vld [vmem:[%s228 + $0x308] sm:$0xff]
        %v366 = vld [vmem:[%s228 + $0x310] sm:$0xff]
        %v367 = vld [vmem:[%s228 + $0x318] sm:$0xff]
        %v368 = vld [vmem:[%s228 + $0x320] sm:$0xff]
        %v369 = vld [vmem:[%s228 + $0x328] sm:$0xff]
        %v370 = vld [vmem:[%s228 + $0x330] sm:$0xff]
        %v371 = vld [vmem:[%s228 + $0x338] sm:$0xff]
        %v372 = vld [vmem:[%s228 + $0x340] sm:$0xff]
        %v373 = vld [vmem:[%s228 + $0x348] sm:$0xff]
        %v374 = vld [vmem:[%s228 + $0x350] sm:$0xff]
        %v375 = vld [vmem:[%s228 + $0x358] sm:$0xff]
        %v376 = vld [vmem:[%s228 + $0x360] sm:$0xff]
        %v377 = vld [vmem:[%s228 + $0x368] sm:$0xff]
        %v378 = vld [vmem:[%s228 + $0x370] sm:$0xff]
        %v379 = vld [vmem:[%s228 + $0x378] sm:$0xff]
        %v380 = vld [vmem:[%s228 + $0x380] sm:$0xff]
        %v381 = vld [vmem:[%s228 + $0x388] sm:$0xff]
        %v382 = vld [vmem:[%s228 + $0x390] sm:$0xff]
        %v383 = vld [vmem:[%s228 + $0x398] sm:$0xff]
        %v384 = vld [vmem:[%s228 + $0x3a0] sm:$0xff]
        %v385 = vld [vmem:[%s228 + $0x3a8] sm:$0xff]
        %v386 = vld [vmem:[%s228 + $0x3b0] sm:$0xff]
        %v387 = vld [vmem:[%s228 + $0x3b8] sm:$0xff]
        %v388 = vld [vmem:[%s228 + $0x3c0] sm:$0xff]
        %v389 = vld [vmem:[%s228 + $0x3c8] sm:$0xff]
        %v390 = vld [vmem:[%s228 + $0x3d0] sm:$0xff]
        %v391 = vld [vmem:[%s228 + $0x3d8] sm:$0xff]
        %v392 = vld [vmem:[%s228 + $0x3e0] sm:$0xff]
        %v393 = vld [vmem:[%s228 + $0x3e8] sm:$0xff]
        %v394 = vld [vmem:[%s228 + $0x3f0] sm:$0xff]
        %v395 = vld [vmem:[%s228 + $0x3f8] sm:$0xff]
        %v396 = vld [vmem:[%s2] sm:$0xff]
        %v397 = vld [vmem:[%s2 + $0x8] sm:$0xff]
        %v398 = vld [vmem:[%s2 + $0x10] sm:$0xff]
        %v399 = vld [vmem:[%s2 + $0x18] sm:$0xff]
        %v400 = vld [vmem:[%s2 + $0x20] sm:$0xff]
        %v401 = vld [vmem:[%s2 + $0x28] sm:$0xff]
        %v402 = vld [vmem:[%s2 + $0x30] sm:$0xff]
        %v403 = vld [vmem:[%s2 + $0x38] sm:$0xff]
        %v404 = vld [vmem:[%s2 + $0x40] sm:$0xff]
        %v405 = vld [vmem:[%s2 + $0x48] sm:$0xff]
        %v406 = vld [vmem:[%s2 + $0x50] sm:$0xff]
        %v407 = vld [vmem:[%s2 + $0x58] sm:$0xff]
        %v408 = vld [vmem:[%s2 + $0x60] sm:$0xff]
        %v409 = vld [vmem:[%s2 + $0x68] sm:$0xff]
        %v410 = vld [vmem:[%s2 + $0x70] sm:$0xff]
        %v411 = vld [vmem:[%s2 + $0x78] sm:$0xff]
        %v412 = vld [vmem:[%s2 + $0x80] sm:$0xff]
        %v413 = vld [vmem:[%s2 + $0x88] sm:$0xff]
        %v414 = vld [vmem:[%s2 + $0x90] sm:$0xff]
        %v415 = vld [vmem:[%s2 + $0x98] sm:$0xff]
        %v416 = vld [vmem:[%s2 + $0xa0] sm:$0xff]
        %v417 = vld [vmem:[%s2 + $0xa8] sm:$0xff]
        %v418 = vld [vmem:[%s2 + $0xb0] sm:$0xff]
        %v419 = vld [vmem:[%s2 + $0xb8] sm:$0xff]
        %v420 = vld [vmem:[%s2 + $0xc0] sm:$0xff]
        %v421 = vld [vmem:[%s2 + $0xc8] sm:$0xff]
        %v422 = vld [vmem:[%s2 + $0xd0] sm:$0xff]
        %v423 = vld [vmem:[%s2 + $0xd8] sm:$0xff]
        %v424 = vld [vmem:[%s2 + $0xe0] sm:$0xff]
        %v425 = vld [vmem:[%s2 + $0xe8] sm:$0xff]
        %v426 = vld [vmem:[%s2 + $0xf0] sm:$0xff]
        %v427 = vld [vmem:[%s2 + $0xf8] sm:$0xff]
        %v428 = vld [vmem:[%s265] sm:$0xff]
        %v429 = vld [vmem:[%s265 + $0x8] sm:$0xff]
        %v430 = vld [vmem:[%s265 + $0x10] sm:$0xff]
        %v431 = vld [vmem:[%s265 + $0x18] sm:$0xff]
        %v432 = vld [vmem:[%s265 + $0x20] sm:$0xff]
        %v433 = vld [vmem:[%s265 + $0x28] sm:$0xff]
        %v434 = vld [vmem:[%s265 + $0x30] sm:$0xff]
        %v435 = vld [vmem:[%s265 + $0x38] sm:$0xff]
        %v436 = vld [vmem:[%s265 + $0x40] sm:$0xff]
        %v437 = vld [vmem:[%s265 + $0x48] sm:$0xff]
        %v438 = vld [vmem:[%s265 + $0x50] sm:$0xff]
        %v439 = vld [vmem:[%s265 + $0x58] sm:$0xff]
        %v440 = vld [vmem:[%s265 + $0x60] sm:$0xff]
        %v441 = vld [vmem:[%s265 + $0x68] sm:$0xff]
        %v442 = vld [vmem:[%s265 + $0x70] sm:$0xff]
        %v443 = vld [vmem:[%s265 + $0x78] sm:$0xff]
        %v444 = vld [vmem:[%s265 + $0x80] sm:$0xff]
        %v445 = vld [vmem:[%s265 + $0x88] sm:$0xff]
        %v446 = vld [vmem:[%s265 + $0x90] sm:$0xff]
        %v447 = vld [vmem:[%s265 + $0x98] sm:$0xff]
        %v448 = vld [vmem:[%s265 + $0xa0] sm:$0xff]
        %v449 = vld [vmem:[%s265 + $0xa8] sm:$0xff]
        %v450 = vld [vmem:[%s265 + $0xb0] sm:$0xff]
        %v451 = vld [vmem:[%s265 + $0xb8] sm:$0xff]
        %v452 = vld [vmem:[%s265 + $0xc0] sm:$0xff]
        %v453 = vld [vmem:[%s265 + $0xc8] sm:$0xff]
        %v454 = vld [vmem:[%s265 + $0xd0] sm:$0xff]
        %v455 = vld [vmem:[%s265 + $0xd8] sm:$0xff]
        %v456 = vld [vmem:[%s265 + $0xe0] sm:$0xff]
        %v457 = vld [vmem:[%s265 + $0xe8] sm:$0xff]
        %v458 = vld [vmem:[%s265 + $0xf0] sm:$0xff]
        %v459 = vld [vmem:[%s265 + $0xf8] sm:$0xff]
        %v460 = vld [vmem:[%s265 + $0x100] sm:$0xff]
        %v461 = vld [vmem:[%s265 + $0x108] sm:$0xff]
        %v462 = vld [vmem:[%s265 + $0x110] sm:$0xff]
        %v463 = vld [vmem:[%s265 + $0x118] sm:$0xff]
        %v464 = vld [vmem:[%s265 + $0x120] sm:$0xff]
        %v465 = vld [vmem:[%s265 + $0x128] sm:$0xff]
        %v466 = vld [vmem:[%s265 + $0x130] sm:$0xff]
        %v467 = vld [vmem:[%s265 + $0x138] sm:$0xff]
        %v468 = vld [vmem:[%s265 + $0x140] sm:$0xff]
        %v469 = vld [vmem:[%s265 + $0x148] sm:$0xff]
        %v470 = vld [vmem:[%s265 + $0x150] sm:$0xff]
        %v471 = vld [vmem:[%s265 + $0x158] sm:$0xff]
        %v472 = vld [vmem:[%s265 + $0x160] sm:$0xff]
        %v473 = vld [vmem:[%s265 + $0x168] sm:$0xff]
        %v474 = vld [vmem:[%s265 + $0x170] sm:$0xff]
        %v475 = vld [vmem:[%s265 + $0x178] sm:$0xff]
        %v476 = vld [vmem:[%s265 + $0x180] sm:$0xff]
        %v477 = vld [vmem:[%s265 + $0x188] sm:$0xff]
        %v478 = vld [vmem:[%s265 + $0x190] sm:$0xff]
        %v479 = vld [vmem:[%s265 + $0x198] sm:$0xff]
        %v480 = vld [vmem:[%s265 + $0x1a0] sm:$0xff]
        %v481 = vld [vmem:[%s265 + $0x1a8] sm:$0xff]
        %v482 = vld [vmem:[%s265 + $0x1b0] sm:$0xff]
        %v483 = vld [vmem:[%s265 + $0x1b8] sm:$0xff]
        %v484 = vld [vmem:[%s265 + $0x1c0] sm:$0xff]
        %v485 = vld [vmem:[%s265 + $0x1c8] sm:$0xff]
        %v486 = vld [vmem:[%s265 + $0x1d0] sm:$0xff]
        %v487 = vld [vmem:[%s265 + $0x1d8] sm:$0xff]
        %v488 = vld [vmem:[%s265 + $0x1e0] sm:$0xff]
        %v489 = vld [vmem:[%s265 + $0x1e8] sm:$0xff]
        %v490 = vld [vmem:[%s265 + $0x1f0] sm:$0xff]
        %v491 = vld [vmem:[%s265 + $0x1f8] sm:$0xff]
        %v492 = vld [vmem:[%s3] sm:$0x1]
        %494 = vset.pattern.permute.xlu0 0
        %495 = vperm.xlu0 %494, %v428
        %v496 = vpop.permute.xlu0 %495
        %499 = vset.pattern.permute.xlu0 0
        %500 = vperm.xlu0 %499, %v429
        %v501 = vpop.permute.xlu0 %500
        %504 = vset.pattern.permute.xlu0 0
        %505 = vperm.xlu0 %504, %v430
        %v506 = vpop.permute.xlu0 %505
        %509 = vset.pattern.permute.xlu0 0
        %510 = vperm.xlu0 %509, %v431
        %v511 = vpop.permute.xlu0 %510
        %514 = vset.pattern.permute.xlu0 0
        %515 = vperm.xlu0 %514, %v432
        %v516 = vpop.permute.xlu0 %515
        %519 = vset.pattern.permute.xlu0 0
        %520 = vperm.xlu0 %519, %v433
        %v521 = vpop.permute.xlu0 %520
        %524 = vset.pattern.permute.xlu0 0
        %525 = vperm.xlu0 %524, %v434
        %v526 = vpop.permute.xlu0 %525
        %529 = vset.pattern.permute.xlu0 0
        %530 = vperm.xlu0 %529, %v435
        %v531 = vpop.permute.xlu0 %530
        %534 = vset.pattern.permute.xlu0 0
        %535 = vperm.xlu0 %534, %v436
        %v536 = vpop.permute.xlu0 %535
        %539 = vset.pattern.permute.xlu0 0
        %540 = vperm.xlu0 %539, %v437
        %v541 = vpop.permute.xlu0 %540
        %544 = vset.pattern.permute.xlu0 0
        %545 = vperm.xlu0 %544, %v438
        %v546 = vpop.permute.xlu0 %545
        %549 = vset.pattern.permute.xlu0 0
        %550 = vperm.xlu0 %549, %v439
        %v551 = vpop.permute.xlu0 %550
        %554 = vset.pattern.permute.xlu0 0
        %555 = vperm.xlu0 %554, %v440
        %v556 = vpop.permute.xlu0 %555
        %559 = vset.pattern.permute.xlu0 0
        %560 = vperm.xlu0 %559, %v441
        %v561 = vpop.permute.xlu0 %560
        %564 = vset.pattern.permute.xlu0 0
        %565 = vperm.xlu0 %564, %v442
        %v566 = vpop.permute.xlu0 %565
        %569 = vset.pattern.permute.xlu0 0
        %570 = vperm.xlu0 %569, %v443
        %v571 = vpop.permute.xlu0 %570
        %574 = vset.pattern.permute.xlu0 0
        %575 = vperm.xlu0 %574, %v444
        %v576 = vpop.permute.xlu0 %575
        %579 = vset.pattern.permute.xlu0 0
        %580 = vperm.xlu0 %579, %v445
        %v581 = vpop.permute.xlu0 %580
        %584 = vset.pattern.permute.xlu0 0
        %585 = vperm.xlu0 %584, %v446
        %v586 = vpop.permute.xlu0 %585
        %589 = vset.pattern.permute.xlu0 0
        %590 = vperm.xlu0 %589, %v447
        %v591 = vpop.permute.xlu0 %590
        %594 = vset.pattern.permute.xlu0 0
        %595 = vperm.xlu0 %594, %v448
        %v596 = vpop.permute.xlu0 %595
        %599 = vset.pattern.permute.xlu0 0
        %600 = vperm.xlu0 %599, %v449
        %v601 = vpop.permute.xlu0 %600
        %604 = vset.pattern.permute.xlu0 0
        %605 = vperm.xlu0 %604, %v450
        %v606 = vpop.permute.xlu0 %605
        %609 = vset.pattern.permute.xlu0 0
        %610 = vperm.xlu0 %609, %v451
        %v611 = vpop.permute.xlu0 %610
        %614 = vset.pattern.permute.xlu0 0
        %615 = vperm.xlu0 %614, %v452
        %v616 = vpop.permute.xlu0 %615
        %619 = vset.pattern.permute.xlu0 0
        %620 = vperm.xlu0 %619, %v453
        %v621 = vpop.permute.xlu0 %620
        %624 = vset.pattern.permute.xlu0 0
        %625 = vperm.xlu0 %624, %v454
        %v626 = vpop.permute.xlu0 %625
        %629 = vset.pattern.permute.xlu0 0
        %630 = vperm.xlu0 %629, %v455
        %v631 = vpop.permute.xlu0 %630
        %634 = vset.pattern.permute.xlu0 0
        %635 = vperm.xlu0 %634, %v456
        %v636 = vpop.permute.xlu0 %635
        %639 = vset.pattern.permute.xlu0 0
        %640 = vperm.xlu0 %639, %v457
        %v641 = vpop.permute.xlu0 %640
        %644 = vset.pattern.permute.xlu0 0
        %645 = vperm.xlu0 %644, %v458
        %v646 = vpop.permute.xlu0 %645
        %649 = vset.pattern.permute.xlu0 0
        %650 = vperm.xlu0 %649, %v459
        %v651 = vpop.permute.xlu0 %650
        %654 = vset.pattern.permute.xlu0 0
        %655 = vperm.xlu0 %654, %v460
        %v656 = vpop.permute.xlu0 %655
        %659 = vset.pattern.permute.xlu0 0
        %660 = vperm.xlu0 %659, %v461
        %v661 = vpop.permute.xlu0 %660
        %664 = vset.pattern.permute.xlu0 0
        %665 = vperm.xlu0 %664, %v462
        %v666 = vpop.permute.xlu0 %665
        %669 = vset.pattern.permute.xlu0 0
        %670 = vperm.xlu0 %669, %v463
        %v671 = vpop.permute.xlu0 %670
        %674 = vset.pattern.permute.xlu0 0
        %675 = vperm.xlu0 %674, %v464
        %v676 = vpop.permute.xlu0 %675
        %679 = vset.pattern.permute.xlu0 0
        %680 = vperm.xlu0 %679, %v465
        %v681 = vpop.permute.xlu0 %680
        %684 = vset.pattern.permute.xlu0 0
        %685 = vperm.xlu0 %684, %v466
        %v686 = vpop.permute.xlu0 %685
        %689 = vset.pattern.permute.xlu0 0
        %690 = vperm.xlu0 %689, %v467
        %v691 = vpop.permute.xlu0 %690
        %694 = vset.pattern.permute.xlu0 0
        %695 = vperm.xlu0 %694, %v468
        %v696 = vpop.permute.xlu0 %695
        %699 = vset.pattern.permute.xlu0 0
        %700 = vperm.xlu0 %699, %v469
        %v701 = vpop.permute.xlu0 %700
        %704 = vset.pattern.permute.xlu0 0
        %705 = vperm.xlu0 %704, %v470
        %v706 = vpop.permute.xlu0 %705
        %709 = vset.pattern.permute.xlu0 0
        %710 = vperm.xlu0 %709, %v471
        %v711 = vpop.permute.xlu0 %710
        %714 = vset.pattern.permute.xlu0 0
        %715 = vperm.xlu0 %714, %v472
        %v716 = vpop.permute.xlu0 %715
        %719 = vset.pattern.permute.xlu0 0
        %720 = vperm.xlu0 %719, %v473
        %v721 = vpop.permute.xlu0 %720
        %724 = vset.pattern.permute.xlu0 0
        %725 = vperm.xlu0 %724, %v474
        %v726 = vpop.permute.xlu0 %725
        %729 = vset.pattern.permute.xlu0 0
        %730 = vperm.xlu0 %729, %v475
        %v731 = vpop.permute.xlu0 %730
        %734 = vset.pattern.permute.xlu0 0
        %735 = vperm.xlu0 %734, %v476
        %v736 = vpop.permute.xlu0 %735
        %739 = vset.pattern.permute.xlu0 0
        %740 = vperm.xlu0 %739, %v477
        %v741 = vpop.permute.xlu0 %740
        %744 = vset.pattern.permute.xlu0 0
        %745 = vperm.xlu0 %744, %v478
        %v746 = vpop.permute.xlu0 %745
        %749 = vset.pattern.permute.xlu0 0
        %750 = vperm.xlu0 %749, %v479
        %v751 = vpop.permute.xlu0 %750
        %754 = vset.pattern.permute.xlu0 0
        %755 = vperm.xlu0 %754, %v480
        %v756 = vpop.permute.xlu0 %755
        %759 = vset.pattern.permute.xlu0 0
        %760 = vperm.xlu0 %759, %v481
        %v761 = vpop.permute.xlu0 %760
        %764 = vset.pattern.permute.xlu0 0
        %765 = vperm.xlu0 %764, %v482
        %v766 = vpop.permute.xlu0 %765
        %769 = vset.pattern.permute.xlu0 0
        %770 = vperm.xlu0 %769, %v483
        %v771 = vpop.permute.xlu0 %770
        %774 = vset.pattern.permute.xlu0 0
        %775 = vperm.xlu0 %774, %v484
        %v776 = vpop.permute.xlu0 %775
        %779 = vset.pattern.permute.xlu0 0
        %780 = vperm.xlu0 %779, %v485
        %v781 = vpop.permute.xlu0 %780
        %784 = vset.pattern.permute.xlu0 0
        %785 = vperm.xlu0 %784, %v486
        %v786 = vpop.permute.xlu0 %785
        %789 = vset.pattern.permute.xlu0 0
        %790 = vperm.xlu0 %789, %v487
        %v791 = vpop.permute.xlu0 %790
        %794 = vset.pattern.permute.xlu0 0
        %795 = vperm.xlu0 %794, %v488
        %v796 = vpop.permute.xlu0 %795
        %799 = vset.pattern.permute.xlu0 0
        %800 = vperm.xlu0 %799, %v489
        %v801 = vpop.permute.xlu0 %800
        %804 = vset.pattern.permute.xlu0 0
        %805 = vperm.xlu0 %804, %v490
        %v806 = vpop.permute.xlu0 %805
        %809 = vset.pattern.permute.xlu0 0
        %810 = vperm.xlu0 %809, %v491
        %v811 = vpop.permute.xlu0 %810
        %v814 = vlaneseq
        %v815 = vshrl.u32 %v814, 7
        %v816 = vsub.s32 0, %v815
        %v817 = vrot.slane %v492, %v816
        %v819 = vmul.f32 %v496, %v817
        %v820 = vmul.f32 %v501, %v817
        %v821 = vmul.f32 %v506, %v817
        %v822 = vmul.f32 %v511, %v817
        %v823 = vmul.f32 %v516, %v817
        %v824 = vmul.f32 %v521, %v817
        %v825 = vmul.f32 %v526, %v817
        %v826 = vmul.f32 %v531, %v817
        %v827 = vmul.f32 %v536, %v817
        %v828 = vmul.f32 %v541, %v817
        %v829 = vmul.f32 %v546, %v817
        %v830 = vmul.f32 %v551, %v817
        %v831 = vmul.f32 %v556, %v817
        %v832 = vmul.f32 %v561, %v817
        %v833 = vmul.f32 %v566, %v817
        %v834 = vmul.f32 %v571, %v817
        %v835 = vmul.f32 %v576, %v817
        %v836 = vmul.f32 %v581, %v817
        %v837 = vmul.f32 %v586, %v817
        %v838 = vmul.f32 %v591, %v817
        %v839 = vmul.f32 %v596, %v817
        %v840 = vmul.f32 %v601, %v817
        %v841 = vmul.f32 %v606, %v817
        %v842 = vmul.f32 %v611, %v817
        %v843 = vmul.f32 %v616, %v817
        %v844 = vmul.f32 %v621, %v817
        %v845 = vmul.f32 %v626, %v817
        %v846 = vmul.f32 %v631, %v817
        %v847 = vmul.f32 %v636, %v817
        %v848 = vmul.f32 %v641, %v817
        %v849 = vmul.f32 %v646, %v817
        %v850 = vmul.f32 %v651, %v817
        %v851 = vmul.f32 %v656, %v817
        %v852 = vmul.f32 %v661, %v817
        %v853 = vmul.f32 %v666, %v817
        %v854 = vmul.f32 %v671, %v817
        %v855 = vmul.f32 %v676, %v817
        %v856 = vmul.f32 %v681, %v817
        %v857 = vmul.f32 %v686, %v817
        %v858 = vmul.f32 %v691, %v817
        %v859 = vmul.f32 %v696, %v817
        %v860 = vmul.f32 %v701, %v817
        %v861 = vmul.f32 %v706, %v817
        %v862 = vmul.f32 %v711, %v817
        %v863 = vmul.f32 %v716, %v817
        %v864 = vmul.f32 %v721, %v817
        %v865 = vmul.f32 %v726, %v817
        %v866 = vmul.f32 %v731, %v817
        %v867 = vmul.f32 %v736, %v817
        %v868 = vmul.f32 %v741, %v817
        %v869 = vmul.f32 %v746, %v817
        %v870 = vmul.f32 %v751, %v817
        %v871 = vmul.f32 %v756, %v817
        %v872 = vmul.f32 %v761, %v817
        %v873 = vmul.f32 %v766, %v817
        %v874 = vmul.f32 %v771, %v817
        %v875 = vmul.f32 %v776, %v817
        %v876 = vmul.f32 %v781, %v817
        %v877 = vmul.f32 %v786, %v817
        %v878 = vmul.f32 %v791, %v817
        %v879 = vmul.f32 %v796, %v817
        %v880 = vmul.f32 %v801, %v817
        %v881 = vmul.f32 %v806, %v817
        %v882 = vmul.f32 %v811, %v817
        %883 = vmatprep.subr.mxu0 0.0
        %884 = vmatpush1.msra.mxu0 %v396
        %885 = vmatprep.subr.mxu0 0.0
        %886 = vmatpush1.msra.mxu0 %v397
        %887 = vmatprep.subr.mxu0 0.0
        %888 = vmatpush1.msra.mxu0 %v398
        %889 = vmatprep.subr.mxu0 0.0
        %890 = vmatpush1.msra.mxu0 %v399
        %891 = vmatprep.subr.mxu0 0.0
        %892 = vmatpush1.msra.mxu0 %v400
        %893 = vmatprep.subr.mxu0 0.0
        %894 = vmatpush1.msra.mxu0 %v401
        %895 = vmatprep.subr.mxu0 0.0
        %896 = vmatpush1.msra.mxu0 %v402
        %897 = vmatprep.subr.mxu0 0.0
        %898 = vmatpush1.msra.mxu0 %v403
        %899 = vmatprep.subr.mxu0 0.0
        %900 = vmatpush1.msra.mxu0 %v404
        %901 = vmatprep.subr.mxu0 0.0
        %902 = vmatpush1.msra.mxu0 %v405
        %903 = vmatprep.subr.mxu0 0.0
        %904 = vmatpush1.msra.mxu0 %v406
        %905 = vmatprep.subr.mxu0 0.0
        %906 = vmatpush1.msra.mxu0 %v407
        %907 = vmatprep.subr.mxu0 0.0
        %908 = vmatpush1.msra.mxu0 %v408
        %909 = vmatprep.subr.mxu0 0.0
        %910 = vmatpush1.msra.mxu0 %v409
        %911 = vmatprep.subr.mxu0 0.0
        %912 = vmatpush1.msra.mxu0 %v410
        %913 = vmatprep.subr.mxu0 0.0
        %914 = vmatpush1.msra.mxu0 %v411
        %915 = vmatprep.subr.mxu0 0.0
        %916 = vmatpush1.msra.mxu0 %v412
        %917 = vmatprep.subr.mxu0 0.0
        %918 = vmatpush1.msra.mxu0 %v413
        %919 = vmatprep.subr.mxu0 0.0
        %920 = vmatpush1.msra.mxu0 %v414
        %921 = vmatprep.subr.mxu0 0.0
        %922 = vmatpush1.msra.mxu0 %v415
        %923 = vmatprep.subr.mxu0 0.0
        %924 = vmatpush1.msra.mxu0 %v416
        %925 = vmatprep.subr.mxu0 0.0
        %926 = vmatpush1.msra.mxu0 %v417
        %927 = vmatprep.subr.mxu0 0.0
        %928 = vmatpush1.msra.mxu0 %v418
        %929 = vmatprep.subr.mxu0 0.0
        %930 = vmatpush1.msra.mxu0 %v419
        %931 = vmatprep.subr.mxu0 0.0
        %932 = vmatpush1.msra.mxu0 %v420
        %933 = vmatprep.subr.mxu0 0.0
        %934 = vmatpush1.msra.mxu0 %v421
        %935 = vmatprep.subr.mxu0 0.0
        %936 = vmatpush1.msra.mxu0 %v422
        %937 = vmatprep.subr.mxu0 0.0
        %938 = vmatpush1.msra.mxu0 %v423
        %939 = vmatprep.subr.mxu0 0.0
        %940 = vmatpush1.msra.mxu0 %v424
        %941 = vmatprep.subr.mxu0 0.0
        %942 = vmatpush1.msra.mxu0 %v425
        %943 = vmatprep.subr.mxu0 0.0
        %944 = vmatpush1.msra.mxu0 %v426
        %945 = vmatprep.subr.mxu0 0.0
        %946 = vmatpush1.msra.mxu0 %v427
        %947 = vmatprep.mubr.f32.mxu0 %v269
        %948 = vmatmul.mubr.f32.gmra.mrb[0].mxu0 %v268
        %v949 = vpop.f32.mrb[0].mxu0
        %v950 = vadd.f32 %v819, %v949
        %v951 = vpop.f32.mrb[0].mxu0
        %952 = vmatprep.mubr.f32.mxu0 %v271
        %953 = vmatmul.mubr.f32.gmra.mrb[0].mxu0 %v270
        %v954 = vpop.f32.mrb[0].mxu0
        %v955 = vadd.f32 %v820, %v954
        %v956 = vpop.f32.mrb[0].mxu0
        %957 = vmatprep.mubr.f32.mxu0 %v273
        %958 = vmatmul.mubr.f32.gmra.mrb[0].mxu0 %v272
        %v959 = vpop.f32.mrb[0].mxu0
        %v960 = vadd.f32 %v821, %v959
        %v961 = vpop.f32.mrb[0].mxu0
        %962 = vmatprep.mubr.f32.mxu0 %v275
        %963 = vmatmul.mubr.f32.gmra.mrb[0].mxu0 %v274
        %v964 = vpop.f32.mrb[0].mxu0
        %v965 = vadd.f32 %v822, %v964
        %v966 = vpop.f32.mrb[0].mxu0
        %967 = vmatprep.mubr.f32.mxu0 %v277
        %968 = vmatmul.mubr.f32.gmra.mrb[0].mxu0 %v276
        %v969 = vpop.f32.mrb[0].mxu0
        %v970 = vadd.f32 %v823, %v969
        %v971 = vpop.f32.mrb[0].mxu0
        %972 = vmatprep.mubr.f32.mxu0 %v279
        %973 = vmatmul.mubr.f32.gmra.mrb[0].mxu0 %v278
        %v974 = vpop.f32.mrb[0].mxu0
        %v975 = vadd.f32 %v824, %v974
        %v976 = vpop.f32.mrb[0].mxu0
        %977 = vmatprep.mubr.f32.mxu0 %v281
        %978 = vmatmul.mubr.f32.gmra.mrb[0].mxu0 %v280
        %v979 = vpop.f32.mrb[0].mxu0
        %v980 = vadd.f32 %v825, %v979
        %v981 = vpop.f32.mrb[0].mxu0
        %982 = vmatprep.mubr.f32.mxu0 %v283
        %983 = vmatmul.mubr.f32.gmra.mrb[0].mxu0 %v282
        %v984 = vpop.f32.mrb[0].mxu0
        %v985 = vadd.f32 %v826, %v984
        %v986 = vpop.f32.mrb[0].mxu0
        %987 = vmatprep.mubr.f32.mxu0 %v285
        %988 = vmatmul.mubr.f32.gmra.mrb[0].mxu0 %v284
        %v989 = vpop.f32.mrb[0].mxu0
        %v990 = vadd.f32 %v827, %v989
        %v991 = vpop.f32.mrb[0].mxu0
        %992 = vmatprep.mubr.f32.mxu0 %v287
        %993 = vmatmul.mubr.f32.gmra.mrb[0].mxu0 %v286
        %v994 = vpop.f32.mrb[0].mxu0
        %v995 = vadd.f32 %v828, %v994
        %v996 = vpop.f32.mrb[0].mxu0
        %997 = vmatprep.mubr.f32.mxu0 %v289
        %998 = vmatmul.mubr.f32.gmra.mrb[0].mxu0 %v288
        %v999 = vpop.f32.mrb[0].mxu0
        %v1000 = vadd.f32 %v829, %v999
        %v1001 = vpop.f32.mrb[0].mxu0
        %1002 = vmatprep.mubr.f32.mxu0 %v291
        %1003 = vmatmul.mubr.f32.gmra.mrb[0].mxu0 %v290
        %v1004 = vpop.f32.mrb[0].mxu0
        %v1005 = vadd.f32 %v830, %v1004
        %v1006 = vpop.f32.mrb[0].mxu0
        %1007 = vmatprep.mubr.f32.mxu0 %v293
        %1008 = vmatmul.mubr.f32.gmra.mrb[0].mxu0 %v292
        %v1009 = vpop.f32.mrb[0].mxu0
        %v1010 = vadd.f32 %v831, %v1009
        %v1011 = vpop.f32.mrb[0].mxu0
        %1012 = vmatprep.mubr.f32.mxu0 %v295
        %1013 = vmatmul.mubr.f32.gmra.mrb[0].mxu0 %v294
        %v1014 = vpop.f32.mrb[0].mxu0
        %v1015 = vadd.f32 %v832, %v1014
        %v1016 = vpop.f32.mrb[0].mxu0
        %1017 = vmatprep.mubr.f32.mxu0 %v297
        %1018 = vmatmul.mubr.f32.gmra.mrb[0].mxu0 %v296
        %v1019 = vpop.f32.mrb[0].mxu0
        %v1020 = vadd.f32 %v833, %v1019
        %v1021 = vpop.f32.mrb[0].mxu0
        %1022 = vmatprep.mubr.f32.mxu0 %v299
        %1023 = vmatmul.mubr.f32.gmra.mrb[0].mxu0 %v298
        %v1024 = vpop.f32.mrb[0].mxu0
        %v1025 = vadd.f32 %v834, %v1024
        %v1026 = vpop.f32.mrb[0].mxu0
        %1027 = vmatprep.mubr.f32.mxu0 %v301
        %1028 = vmatmul.mubr.f32.gmra.mrb[0].mxu0 %v300
        %v1029 = vpop.f32.mrb[0].mxu0
        %v1030 = vadd.f32 %v835, %v1029
        %v1031 = vpop.f32.mrb[0].mxu0
        %1032 = vmatprep.mubr.f32.mxu0 %v303
        %1033 = vmatmul.mubr.f32.gmra.mrb[0].mxu0 %v302
        %v1034 = vpop.f32.mrb[0].mxu0
        %v1035 = vadd.f32 %v836, %v1034
        %v1036 = vpop.f32.mrb[0].mxu0
        %1037 = vmatprep.mubr.f32.mxu0 %v305
        %1038 = vmatmul.mubr.f32.gmra.mrb[0].mxu0 %v304
        %v1039 = vpop.f32.mrb[0].mxu0
        %v1040 = vadd.f32 %v837, %v1039
        %v1041 = vpop.f32.mrb[0].mxu0
        %1042 = vmatprep.mubr.f32.mxu0 %v307
        %1043 = vmatmul.mubr.f32.gmra.mrb[0].mxu0 %v306
        %v1044 = vpop.f32.mrb[0].mxu0
        %v1045 = vadd.f32 %v838, %v1044
        %v1046 = vpop.f32.mrb[0].mxu0
        %1047 = vmatprep.mubr.f32.mxu0 %v309
        %1048 = vmatmul.mubr.f32.gmra.mrb[0].mxu0 %v308
        %v1049 = vpop.f32.mrb[0].mxu0
        %v1050 = vadd.f32 %v839, %v1049
        %v1051 = vpop.f32.mrb[0].mxu0
        %1052 = vmatprep.mubr.f32.mxu0 %v311
        %1053 = vmatmul.mubr.f32.gmra.mrb[0].mxu0 %v310
        %v1054 = vpop.f32.mrb[0].mxu0
        %v1055 = vadd.f32 %v840, %v1054
        %v1056 = vpop.f32.mrb[0].mxu0
        %1057 = vmatprep.mubr.f32.mxu0 %v313
        %1058 = vmatmul.mubr.f32.gmra.mrb[0].mxu0 %v312
        %v1059 = vpop.f32.mrb[0].mxu0
        %v1060 = vadd.f32 %v841, %v1059
        %v1061 = vpop.f32.mrb[0].mxu0
        %1062 = vmatprep.mubr.f32.mxu0 %v315
        %1063 = vmatmul.mubr.f32.gmra.mrb[0].mxu0 %v314
        %v1064 = vpop.f32.mrb[0].mxu0
        %v1065 = vadd.f32 %v842, %v1064
        %v1066 = vpop.f32.mrb[0].mxu0
        %1067 = vmatprep.mubr.f32.mxu0 %v317
        %1068 = vmatmul.mubr.f32.gmra.mrb[0].mxu0 %v316
        %v1069 = vpop.f32.mrb[0].mxu0
        %v1070 = vadd.f32 %v843, %v1069
        %v1071 = vpop.f32.mrb[0].mxu0
        %1072 = vmatprep.mubr.f32.mxu0 %v319
        %1073 = vmatmul.mubr.f32.gmra.mrb[0].mxu0 %v318
        %v1074 = vpop.f32.mrb[0].mxu0
        %v1075 = vadd.f32 %v844, %v1074
        %v1076 = vpop.f32.mrb[0].mxu0
        %1077 = vmatprep.mubr.f32.mxu0 %v321
        %1078 = vmatmul.mubr.f32.gmra.mrb[0].mxu0 %v320
        %v1079 = vpop.f32.mrb[0].mxu0
        %v1080 = vadd.f32 %v845, %v1079
        %v1081 = vpop.f32.mrb[0].mxu0
        %1082 = vmatprep.mubr.f32.mxu0 %v323
        %1083 = vmatmul.mubr.f32.gmra.mrb[0].mxu0 %v322
        %v1084 = vpop.f32.mrb[0].mxu0
        %v1085 = vadd.f32 %v846, %v1084
        %v1086 = vpop.f32.mrb[0].mxu0
        %1087 = vmatprep.mubr.f32.mxu0 %v325
        %1088 = vmatmul.mubr.f32.gmra.mrb[0].mxu0 %v324
        %v1089 = vpop.f32.mrb[0].mxu0
        %v1090 = vadd.f32 %v847, %v1089
        %v1091 = vpop.f32.mrb[0].mxu0
        %1092 = vmatprep.mubr.f32.mxu0 %v327
        %1093 = vmatmul.mubr.f32.gmra.mrb[0].mxu0 %v326
        %v1094 = vpop.f32.mrb[0].mxu0
        %v1095 = vadd.f32 %v848, %v1094
        %v1096 = vpop.f32.mrb[0].mxu0
        %1097 = vmatprep.mubr.f32.mxu0 %v329
        %1098 = vmatmul.mubr.f32.gmra.mrb[0].mxu0 %v328
        %v1099 = vpop.f32.mrb[0].mxu0
        %v1100 = vadd.f32 %v849, %v1099
        %v1101 = vpop.f32.mrb[0].mxu0
        %1102 = vmatprep.mubr.f32.mxu0 %v331
        %1103 = vmatmul.mubr.f32.gmra.mrb[0].mxu0 %v330
        %v1104 = vpop.f32.mrb[0].mxu0
        %v1105 = vadd.f32 %v850, %v1104
        %v1106 = vpop.f32.mrb[0].mxu0
        %1107 = vmatprep.mubr.f32.mxu0 %v333
        %1108 = vmatmul.mubr.f32.gmra.mrb[0].mxu0 %v332
        %v1109 = vpop.f32.mrb[0].mxu0
        %v1110 = vadd.f32 %v851, %v1109
        %v1111 = vpop.f32.mrb[0].mxu0
        %1112 = vmatprep.mubr.f32.mxu0 %v335
        %1113 = vmatmul.mubr.f32.gmra.mrb[0].mxu0 %v334
        %v1114 = vpop.f32.mrb[0].mxu0
        %v1115 = vadd.f32 %v852, %v1114
        %v1116 = vpop.f32.mrb[0].mxu0
        %1117 = vmatprep.mubr.f32.mxu0 %v337
        %1118 = vmatmul.mubr.f32.gmra.mrb[0].mxu0 %v336
        %v1119 = vpop.f32.mrb[0].mxu0
        %v1120 = vadd.f32 %v853, %v1119
        %v1121 = vpop.f32.mrb[0].mxu0
        %1122 = vmatprep.mubr.f32.mxu0 %v339
        %1123 = vmatmul.mubr.f32.gmra.mrb[0].mxu0 %v338
        %v1124 = vpop.f32.mrb[0].mxu0
        %v1125 = vadd.f32 %v854, %v1124
        %v1126 = vpop.f32.mrb[0].mxu0
        %1127 = vmatprep.mubr.f32.mxu0 %v341
        %1128 = vmatmul.mubr.f32.gmra.mrb[0].mxu0 %v340
        %v1129 = vpop.f32.mrb[0].mxu0
        %v1130 = vadd.f32 %v855, %v1129
        %v1131 = vpop.f32.mrb[0].mxu0
        %1132 = vmatprep.mubr.f32.mxu0 %v343
        %1133 = vmatmul.mubr.f32.gmra.mrb[0].mxu0 %v342
        %v1134 = vpop.f32.mrb[0].mxu0
        %v1135 = vadd.f32 %v856, %v1134
        %v1136 = vpop.f32.mrb[0].mxu0
        %1137 = vmatprep.mubr.f32.mxu0 %v345
        %1138 = vmatmul.mubr.f32.gmra.mrb[0].mxu0 %v344
        %v1139 = vpop.f32.mrb[0].mxu0
        %v1140 = vadd.f32 %v857, %v1139
        %v1141 = vpop.f32.mrb[0].mxu0
        %1142 = vmatprep.mubr.f32.mxu0 %v347
        %1143 = vmatmul.mubr.f32.gmra.mrb[0].mxu0 %v346
        %v1144 = vpop.f32.mrb[0].mxu0
        %v1145 = vadd.f32 %v858, %v1144
        %v1146 = vpop.f32.mrb[0].mxu0
        %1147 = vmatprep.mubr.f32.mxu0 %v349
        %1148 = vmatmul.mubr.f32.gmra.mrb[0].mxu0 %v348
        %v1149 = vpop.f32.mrb[0].mxu0
        %v1150 = vadd.f32 %v859, %v1149
        %v1151 = vpop.f32.mrb[0].mxu0
        %1152 = vmatprep.mubr.f32.mxu0 %v351
        %1153 = vmatmul.mubr.f32.gmra.mrb[0].mxu0 %v350
        %v1154 = vpop.f32.mrb[0].mxu0
        %v1155 = vadd.f32 %v860, %v1154
        %v1156 = vpop.f32.mrb[0].mxu0
        %1157 = vmatprep.mubr.f32.mxu0 %v353
        %1158 = vmatmul.mubr.f32.gmra.mrb[0].mxu0 %v352
        %v1159 = vpop.f32.mrb[0].mxu0
        %v1160 = vadd.f32 %v861, %v1159
        %v1161 = vpop.f32.mrb[0].mxu0
        %1162 = vmatprep.mubr.f32.mxu0 %v355
        %1163 = vmatmul.mubr.f32.gmra.mrb[0].mxu0 %v354
        %v1164 = vpop.f32.mrb[0].mxu0
        %v1165 = vadd.f32 %v862, %v1164
        %v1166 = vpop.f32.mrb[0].mxu0
        %1167 = vmatprep.mubr.f32.mxu0 %v357
        %1168 = vmatmul.mubr.f32.gmra.mrb[0].mxu0 %v356
        %v1169 = vpop.f32.mrb[0].mxu0
        %v1170 = vadd.f32 %v863, %v1169
        %v1171 = vpop.f32.mrb[0].mxu0
        %1172 = vmatprep.mubr.f32.mxu0 %v359
        %1173 = vmatmul.mubr.f32.gmra.mrb[0].mxu0 %v358
        %v1174 = vpop.f32.mrb[0].mxu0
        %v1175 = vadd.f32 %v864, %v1174
        %v1176 = vpop.f32.mrb[0].mxu0
        %1177 = vmatprep.mubr.f32.mxu0 %v361
        %1178 = vmatmul.mubr.f32.gmra.mrb[0].mxu0 %v360
        %v1179 = vpop.f32.mrb[0].mxu0
        %v1180 = vadd.f32 %v865, %v1179
        %v1181 = vpop.f32.mrb[0].mxu0
        %1182 = vmatprep.mubr.f32.mxu0 %v363
        %1183 = vmatmul.mubr.f32.gmra.mrb[0].mxu0 %v362
        %v1184 = vpop.f32.mrb[0].mxu0
        %v1185 = vadd.f32 %v866, %v1184
        %v1186 = vpop.f32.mrb[0].mxu0
        %1187 = vmatprep.mubr.f32.mxu0 %v365
        %1188 = vmatmul.mubr.f32.gmra.mrb[0].mxu0 %v364
        %v1189 = vpop.f32.mrb[0].mxu0
        %v1190 = vadd.f32 %v867, %v1189
        %v1191 = vpop.f32.mrb[0].mxu0
        %1192 = vmatprep.mubr.f32.mxu0 %v367
        %1193 = vmatmul.mubr.f32.gmra.mrb[0].mxu0 %v366
        %v1194 = vpop.f32.mrb[0].mxu0
        %v1195 = vadd.f32 %v868, %v1194
        %v1196 = vpop.f32.mrb[0].mxu0
        %1197 = vmatprep.mubr.f32.mxu0 %v369
        %1198 = vmatmul.mubr.f32.gmra.mrb[0].mxu0 %v368
        %v1199 = vpop.f32.mrb[0].mxu0
        %v1200 = vadd.f32 %v869, %v1199
        %v1201 = vpop.f32.mrb[0].mxu0
        %1202 = vmatprep.mubr.f32.mxu0 %v371
        %1203 = vmatmul.mubr.f32.gmra.mrb[0].mxu0 %v370
        %v1204 = vpop.f32.mrb[0].mxu0
        %v1205 = vadd.f32 %v870, %v1204
        %v1206 = vpop.f32.mrb[0].mxu0
        %1207 = vmatprep.mubr.f32.mxu0 %v373
        %1208 = vmatmul.mubr.f32.gmra.mrb[0].mxu0 %v372
        %v1209 = vpop.f32.mrb[0].mxu0
        %v1210 = vadd.f32 %v871, %v1209
        %v1211 = vpop.f32.mrb[0].mxu0
        %1212 = vmatprep.mubr.f32.mxu0 %v375
        %1213 = vmatmul.mubr.f32.gmra.mrb[0].mxu0 %v374
        %v1214 = vpop.f32.mrb[0].mxu0
        %v1215 = vadd.f32 %v872, %v1214
        %v1216 = vpop.f32.mrb[0].mxu0
        %1217 = vmatprep.mubr.f32.mxu0 %v377
        %1218 = vmatmul.mubr.f32.gmra.mrb[0].mxu0 %v376
        %v1219 = vpop.f32.mrb[0].mxu0
        %v1220 = vadd.f32 %v873, %v1219
        %v1221 = vpop.f32.mrb[0].mxu0
        %1222 = vmatprep.mubr.f32.mxu0 %v379
        %1223 = vmatmul.mubr.f32.gmra.mrb[0].mxu0 %v378
        %v1224 = vpop.f32.mrb[0].mxu0
        %v1225 = vadd.f32 %v874, %v1224
        %v1226 = vpop.f32.mrb[0].mxu0
        %1227 = vmatprep.mubr.f32.mxu0 %v381
        %1228 = vmatmul.mubr.f32.gmra.mrb[0].mxu0 %v380
        %v1229 = vpop.f32.mrb[0].mxu0
        %v1230 = vadd.f32 %v875, %v1229
        %v1231 = vpop.f32.mrb[0].mxu0
        %1232 = vmatprep.mubr.f32.mxu0 %v383
        %1233 = vmatmul.mubr.f32.gmra.mrb[0].mxu0 %v382
        %v1234 = vpop.f32.mrb[0].mxu0
        %v1235 = vadd.f32 %v876, %v1234
        %v1236 = vpop.f32.mrb[0].mxu0
        %1237 = vmatprep.mubr.f32.mxu0 %v385
        %1238 = vmatmul.mubr.f32.gmra.mrb[0].mxu0 %v384
        %v1239 = vpop.f32.mrb[0].mxu0
        %v1240 = vadd.f32 %v877, %v1239
        %v1241 = vpop.f32.mrb[0].mxu0
        %1242 = vmatprep.mubr.f32.mxu0 %v387
        %1243 = vmatmul.mubr.f32.gmra.mrb[0].mxu0 %v386
        %v1244 = vpop.f32.mrb[0].mxu0
        %v1245 = vadd.f32 %v878, %v1244
        %v1246 = vpop.f32.mrb[0].mxu0
        %1247 = vmatprep.mubr.f32.mxu0 %v389
        %1248 = vmatmul.mubr.f32.gmra.mrb[0].mxu0 %v388
        %v1249 = vpop.f32.mrb[0].mxu0
        %v1250 = vadd.f32 %v879, %v1249
        %v1251 = vpop.f32.mrb[0].mxu0
        %1252 = vmatprep.mubr.f32.mxu0 %v391
        %1253 = vmatmul.mubr.f32.gmra.mrb[0].mxu0 %v390
        %v1254 = vpop.f32.mrb[0].mxu0
        %v1255 = vadd.f32 %v880, %v1254
        %v1256 = vpop.f32.mrb[0].mxu0
        %1257 = vmatprep.mubr.f32.mxu0 %v393
        %1258 = vmatmul.mubr.f32.gmra.mrb[0].mxu0 %v392
        %v1259 = vpop.f32.mrb[0].mxu0
        %v1260 = vadd.f32 %v881, %v1259
        %v1261 = vpop.f32.mrb[0].mxu0
        %1262 = vmatprep.mubr.f32.mxu0 %v395
        %1263 = vmatmul.mubr.f32.gmra.mrb[0].mxu0 %v394
        %v1264 = vpop.f32.mrb[0].mxu0
        %v1265 = vadd.f32 %v882, %v1264
        %v1266 = vpop.f32.mrb[0].mxu0
        %1267 = vdwg.mxu0
        %v1268 = vld [vmem:[%s4] sm:$0x1]
        %v1269 = vlaneseq
        %v1270 = vshrl.u32 %v1269, 7
        %v1271 = vsub.s32 0, %v1270
        %v1272 = vrot.slane %v1268, %v1271
        %v1273 = vadd.f32 %v950, %v1272
        %v1274 = vadd.f32 %v955, %v1272
        %v1275 = vadd.f32 %v960, %v1272
        %v1276 = vadd.f32 %v965, %v1272
        %v1277 = vadd.f32 %v970, %v1272
        %v1278 = vadd.f32 %v975, %v1272
        %v1279 = vadd.f32 %v980, %v1272
        %v1280 = vadd.f32 %v985, %v1272
        %v1281 = vadd.f32 %v990, %v1272
        %v1282 = vadd.f32 %v995, %v1272
        %v1283 = vadd.f32 %v1000, %v1272
        %v1284 = vadd.f32 %v1005, %v1272
        %v1285 = vadd.f32 %v1010, %v1272
        %v1286 = vadd.f32 %v1015, %v1272
        %v1287 = vadd.f32 %v1020, %v1272
        %v1288 = vadd.f32 %v1025, %v1272
        %v1289 = vadd.f32 %v1030, %v1272
        %v1290 = vadd.f32 %v1035, %v1272
        %v1291 = vadd.f32 %v1040, %v1272
        %v1292 = vadd.f32 %v1045, %v1272
        %v1293 = vadd.f32 %v1050, %v1272
        %v1294 = vadd.f32 %v1055, %v1272
        %v1295 = vadd.f32 %v1060, %v1272
        %v1296 = vadd.f32 %v1065, %v1272
        %v1297 = vadd.f32 %v1070, %v1272
        %v1298 = vadd.f32 %v1075, %v1272
        %v1299 = vadd.f32 %v1080, %v1272
        %v1300 = vadd.f32 %v1085, %v1272
        %v1301 = vadd.f32 %v1090, %v1272
        %v1302 = vadd.f32 %v1095, %v1272
        %v1303 = vadd.f32 %v1100, %v1272
        %v1304 = vadd.f32 %v1105, %v1272
        %v1305 = vadd.f32 %v1110, %v1272
        %v1306 = vadd.f32 %v1115, %v1272
        %v1307 = vadd.f32 %v1120, %v1272
        %v1308 = vadd.f32 %v1125, %v1272
        %v1309 = vadd.f32 %v1130, %v1272
        %v1310 = vadd.f32 %v1135, %v1272
        %v1311 = vadd.f32 %v1140, %v1272
        %v1312 = vadd.f32 %v1145, %v1272
        %v1313 = vadd.f32 %v1150, %v1272
        %v1314 = vadd.f32 %v1155, %v1272
        %v1315 = vadd.f32 %v1160, %v1272
        %v1316 = vadd.f32 %v1165, %v1272
        %v1317 = vadd.f32 %v1170, %v1272
        %v1318 = vadd.f32 %v1175, %v1272
        %v1319 = vadd.f32 %v1180, %v1272
        %v1320 = vadd.f32 %v1185, %v1272
        %v1321 = vadd.f32 %v1190, %v1272
        %v1322 = vadd.f32 %v1195, %v1272
        %v1323 = vadd.f32 %v1200, %v1272
        %v1324 = vadd.f32 %v1205, %v1272
        %v1325 = vadd.f32 %v1210, %v1272
        %v1326 = vadd.f32 %v1215, %v1272
        %v1327 = vadd.f32 %v1220, %v1272
        %v1328 = vadd.f32 %v1225, %v1272
        %v1329 = vadd.f32 %v1230, %v1272
        %v1330 = vadd.f32 %v1235, %v1272
        %v1331 = vadd.f32 %v1240, %v1272
        %v1332 = vadd.f32 %v1245, %v1272
        %v1333 = vadd.f32 %v1250, %v1272
        %v1334 = vadd.f32 %v1255, %v1272
        %v1335 = vadd.f32 %v1260, %v1272
        %v1336 = vadd.f32 %v1265, %v1272
        %v1337 = vmul.f32 %v1273, 0.5
        %v1338 = vmul.f32 %v1274, 0.5
        %v1339 = vmul.f32 %v1275, 0.5
        %v1340 = vmul.f32 %v1276, 0.5
        %v1341 = vmul.f32 %v1277, 0.5
        %v1342 = vmul.f32 %v1278, 0.5
        %v1343 = vmul.f32 %v1279, 0.5
        %v1344 = vmul.f32 %v1280, 0.5
        %v1345 = vmul.f32 %v1281, 0.5
        %v1346 = vmul.f32 %v1282, 0.5
        %v1347 = vmul.f32 %v1283, 0.5
        %v1348 = vmul.f32 %v1284, 0.5
        %v1349 = vmul.f32 %v1285, 0.5
        %v1350 = vmul.f32 %v1286, 0.5
        %v1351 = vmul.f32 %v1287, 0.5
        %v1352 = vmul.f32 %v1288, 0.5
        %v1353 = vmul.f32 %v1289, 0.5
        %v1354 = vmul.f32 %v1290, 0.5
        %v1355 = vmul.f32 %v1291, 0.5
        %v1356 = vmul.f32 %v1292, 0.5
        %v1357 = vmul.f32 %v1293, 0.5
        %v1358 = vmul.f32 %v1294, 0.5
        %v1359 = vmul.f32 %v1295, 0.5
        %v1360 = vmul.f32 %v1296, 0.5
        %v1361 = vmul.f32 %v1297, 0.5
        %v1362 = vmul.f32 %v1298, 0.5
        %v1363 = vmul.f32 %v1299, 0.5
        %v1364 = vmul.f32 %v1300, 0.5
        %v1365 = vmul.f32 %v1301, 0.5
        %v1366 = vmul.f32 %v1302, 0.5
        %v1367 = vmul.f32 %v1303, 0.5
        %v1368 = vmul.f32 %v1304, 0.5
        %v1369 = vmul.f32 %v1305, 0.5
        %v1370 = vmul.f32 %v1306, 0.5
        %v1371 = vmul.f32 %v1307, 0.5
        %v1372 = vmul.f32 %v1308, 0.5
        %v1373 = vmul.f32 %v1309, 0.5
        %v1374 = vmul.f32 %v1310, 0.5
        %v1375 = vmul.f32 %v1311, 0.5
        %v1376 = vmul.f32 %v1312, 0.5
        %v1377 = vmul.f32 %v1313, 0.5
        %v1378 = vmul.f32 %v1314, 0.5
        %v1379 = vmul.f32 %v1315, 0.5
        %v1380 = vmul.f32 %v1316, 0.5
        %v1381 = vmul.f32 %v1317, 0.5
        %v1382 = vmul.f32 %v1318, 0.5
        %v1383 = vmul.f32 %v1319, 0.5
        %v1384 = vmul.f32 %v1320, 0.5
        %v1385 = vmul.f32 %v1321, 0.5
        %v1386 = vmul.f32 %v1322, 0.5
        %v1387 = vmul.f32 %v1323, 0.5
        %v1388 = vmul.f32 %v1324, 0.5
        %v1389 = vmul.f32 %v1325, 0.5
        %v1390 = vmul.f32 %v1326, 0.5
        %v1391 = vmul.f32 %v1327, 0.5
        %v1392 = vmul.f32 %v1328, 0.5
        %v1393 = vmul.f32 %v1329, 0.5
        %v1394 = vmul.f32 %v1330, 0.5
        %v1395 = vmul.f32 %v1331, 0.5
        %v1396 = vmul.f32 %v1332, 0.5
        %v1397 = vmul.f32 %v1333, 0.5
        %v1398 = vmul.f32 %v1334, 0.5
        %v1399 = vmul.f32 %v1335, 0.5
        %v1400 = vmul.f32 %v1336, 0.5
        %v1401 = vmul.f32 %v1273, 0.044715
        %v1402 = vmul.f32 %v1274, 0.044715
        %v1403 = vmul.f32 %v1275, 0.044715
        %v1404 = vmul.f32 %v1276, 0.044715
        %v1405 = vmul.f32 %v1277, 0.044715
        %v1406 = vmul.f32 %v1278, 0.044715
        %v1407 = vmul.f32 %v1279, 0.044715
        %v1408 = vmul.f32 %v1280, 0.044715
        %v1409 = vmul.f32 %v1281, 0.044715
        %v1410 = vmul.f32 %v1282, 0.044715
        %v1411 = vmul.f32 %v1283, 0.044715
        %v1412 = vmul.f32 %v1284, 0.044715
        %v1413 = vmul.f32 %v1285, 0.044715
        %v1414 = vmul.f32 %v1286, 0.044715
        %v1415 = vmul.f32 %v1287, 0.044715
        %v1416 = vmul.f32 %v1288, 0.044715
        %v1417 = vmul.f32 %v1289, 0.044715
        %v1418 = vmul.f32 %v1290, 0.044715
        %v1419 = vmul.f32 %v1291, 0.044715
        %v1420 = vmul.f32 %v1292, 0.044715
        %v1421 = vmul.f32 %v1293, 0.044715
        %v1422 = vmul.f32 %v1294, 0.044715
        %v1423 = vmul.f32 %v1295, 0.044715
        %v1424 = vmul.f32 %v1296, 0.044715
        %v1425 = vmul.f32 %v1297, 0.044715
        %v1426 = vmul.f32 %v1298, 0.044715
        %v1427 = vmul.f32 %v1299, 0.044715
        %v1428 = vmul.f32 %v1300, 0.044715
        %v1429 = vmul.f32 %v1301, 0.044715
        %v1430 = vmul.f32 %v1302, 0.044715
        %v1431 = vmul.f32 %v1303, 0.044715
        %v1432 = vmul.f32 %v1304, 0.044715
        %v1433 = vmul.f32 %v1305, 0.044715
        %v1434 = vmul.f32 %v1306, 0.044715
        %v1435 = vmul.f32 %v1307, 0.044715
        %v1436 = vmul.f32 %v1308, 0.044715
        %v1437 = vmul.f32 %v1309, 0.044715
        %v1438 = vmul.f32 %v1310, 0.044715
        %v1439 = vmul.f32 %v1311, 0.044715
        %v1440 = vmul.f32 %v1312, 0.044715
        %v1441 = vmul.f32 %v1313, 0.044715
        %v1442 = vmul.f32 %v1314, 0.044715
        %v1443 = vmul.f32 %v1315, 0.044715
        %v1444 = vmul.f32 %v1316, 0.044715
        %v1445 = vmul.f32 %v1317, 0.044715
        %v1446 = vmul.f32 %v1318, 0.044715
        %v1447 = vmul.f32 %v1319, 0.044715
        %v1448 = vmul.f32 %v1320, 0.044715
        %v1449 = vmul.f32 %v1321, 0.044715
        %v1450 = vmul.f32 %v1322, 0.044715
        %v1451 = vmul.f32 %v1323, 0.044715
        %v1452 = vmul.f32 %v1324, 0.044715
        %v1453 = vmul.f32 %v1325, 0.044715
        %v1454 = vmul.f32 %v1326, 0.044715
        %v1455 = vmul.f32 %v1327, 0.044715
        %v1456 = vmul.f32 %v1328, 0.044715
        %v1457 = vmul.f32 %v1329, 0.044715
        %v1458 = vmul.f32 %v1330, 0.044715
        %v1459 = vmul.f32 %v1331, 0.044715
        %v1460 = vmul.f32 %v1332, 0.044715
        %v1461 = vmul.f32 %v1333, 0.044715
        %v1462 = vmul.f32 %v1334, 0.044715
        %v1463 = vmul.f32 %v1335, 0.044715
        %v1464 = vmul.f32 %v1336, 0.044715
        %v1465 = vmul.f32 %v1401, %v1273
        %v1466 = vmul.f32 %v1402, %v1274
        %v1467 = vmul.f32 %v1403, %v1275
        %v1468 = vmul.f32 %v1404, %v1276
        %v1469 = vmul.f32 %v1405, %v1277
        %v1470 = vmul.f32 %v1406, %v1278
        %v1471 = vmul.f32 %v1407, %v1279
        %v1472 = vmul.f32 %v1408, %v1280
        %v1473 = vmul.f32 %v1409, %v1281
        %v1474 = vmul.f32 %v1410, %v1282
        %v1475 = vmul.f32 %v1411, %v1283
        %v1476 = vmul.f32 %v1412, %v1284
        %v1477 = vmul.f32 %v1413, %v1285
        %v1478 = vmul.f32 %v1414, %v1286
        %v1479 = vmul.f32 %v1415, %v1287
        %v1480 = vmul.f32 %v1416, %v1288
        %v1481 = vmul.f32 %v1417, %v1289
        %v1482 = vmul.f32 %v1418, %v1290
        %v1483 = vmul.f32 %v1419, %v1291
        %v1484 = vmul.f32 %v1420, %v1292
        %v1485 = vmul.f32 %v1421, %v1293
        %v1486 = vmul.f32 %v1422, %v1294
        %v1487 = vmul.f32 %v1423, %v1295
        %v1488 = vmul.f32 %v1424, %v1296
        %v1489 = vmul.f32 %v1425, %v1297
        %v1490 = vmul.f32 %v1426, %v1298
        %v1491 = vmul.f32 %v1427, %v1299
        %v1492 = vmul.f32 %v1428, %v1300
        %v1493 = vmul.f32 %v1429, %v1301
        %v1494 = vmul.f32 %v1430, %v1302
        %v1495 = vmul.f32 %v1431, %v1303
        %v1496 = vmul.f32 %v1432, %v1304
        %v1497 = vmul.f32 %v1433, %v1305
        %v1498 = vmul.f32 %v1434, %v1306
        %v1499 = vmul.f32 %v1435, %v1307
        %v1500 = vmul.f32 %v1436, %v1308
        %v1501 = vmul.f32 %v1437, %v1309
        %v1502 = vmul.f32 %v1438, %v1310
        %v1503 = vmul.f32 %v1439, %v1311
        %v1504 = vmul.f32 %v1440, %v1312
        %v1505 = vmul.f32 %v1441, %v1313
        %v1506 = vmul.f32 %v1442, %v1314
        %v1507 = vmul.f32 %v1443, %v1315
        %v1508 = vmul.f32 %v1444, %v1316
        %v1509 = vmul.f32 %v1445, %v1317
        %v1510 = vmul.f32 %v1446, %v1318
        %v1511 = vmul.f32 %v1447, %v1319
        %v1512 = vmul.f32 %v1448, %v1320
        %v1513 = vmul.f32 %v1449, %v1321
        %v1514 = vmul.f32 %v1450, %v1322
        %v1515 = vmul.f32 %v1451, %v1323
        %v1516 = vmul.f32 %v1452, %v1324
        %v1517 = vmul.f32 %v1453, %v1325
        %v1518 = vmul.f32 %v1454, %v1326
        %v1519 = vmul.f32 %v1455, %v1327
        %v1520 = vmul.f32 %v1456, %v1328
        %v1521 = vmul.f32 %v1457, %v1329
        %v1522 = vmul.f32 %v1458, %v1330
        %v1523 = vmul.f32 %v1459, %v1331
        %v1524 = vmul.f32 %v1460, %v1332
        %v1525 = vmul.f32 %v1461, %v1333
        %v1526 = vmul.f32 %v1462, %v1334
        %v1527 = vmul.f32 %v1463, %v1335
        %v1528 = vmul.f32 %v1464, %v1336
        %v1529 = vmul.f32 %v1465, %v1273
        %v1530 = vmul.f32 %v1466, %v1274
        %v1531 = vmul.f32 %v1467, %v1275
        %v1532 = vmul.f32 %v1468, %v1276
        %v1533 = vmul.f32 %v1469, %v1277
        %v1534 = vmul.f32 %v1470, %v1278
        %v1535 = vmul.f32 %v1471, %v1279
        %v1536 = vmul.f32 %v1472, %v1280
        %v1537 = vmul.f32 %v1473, %v1281
        %v1538 = vmul.f32 %v1474, %v1282
        %v1539 = vmul.f32 %v1475, %v1283
        %v1540 = vmul.f32 %v1476, %v1284
        %v1541 = vmul.f32 %v1477, %v1285
        %v1542 = vmul.f32 %v1478, %v1286
        %v1543 = vmul.f32 %v1479, %v1287
        %v1544 = vmul.f32 %v1480, %v1288
        %v1545 = vmul.f32 %v1481, %v1289
        %v1546 = vmul.f32 %v1482, %v1290
        %v1547 = vmul.f32 %v1483, %v1291
        %v1548 = vmul.f32 %v1484, %v1292
        %v1549 = vmul.f32 %v1485, %v1293
        %v1550 = vmul.f32 %v1486, %v1294
        %v1551 = vmul.f32 %v1487, %v1295
        %v1552 = vmul.f32 %v1488, %v1296
        %v1553 = vmul.f32 %v1489, %v1297
        %v1554 = vmul.f32 %v1490, %v1298
        %v1555 = vmul.f32 %v1491, %v1299
        %v1556 = vmul.f32 %v1492, %v1300
        %v1557 = vmul.f32 %v1493, %v1301
        %v1558 = vmul.f32 %v1494, %v1302
        %v1559 = vmul.f32 %v1495, %v1303
        %v1560 = vmul.f32 %v1496, %v1304
        %v1561 = vmul.f32 %v1497, %v1305
        %v1562 = vmul.f32 %v1498, %v1306
        %v1563 = vmul.f32 %v1499, %v1307
        %v1564 = vmul.f32 %v1500, %v1308
        %v1565 = vmul.f32 %v1501, %v1309
        %v1566 = vmul.f32 %v1502, %v1310
        %v1567 = vmul.f32 %v1503, %v1311
        %v1568 = vmul.f32 %v1504, %v1312
        %v1569 = vmul.f32 %v1505, %v1313
        %v1570 = vmul.f32 %v1506, %v1314
        %v1571 = vmul.f32 %v1507, %v1315
        %v1572 = vmul.f32 %v1508, %v1316
        %v1573 = vmul.f32 %v1509, %v1317
        %v1574 = vmul.f32 %v1510, %v1318
        %v1575 = vmul.f32 %v1511, %v1319
        %v1576 = vmul.f32 %v1512, %v1320
        %v1577 = vmul.f32 %v1513, %v1321
        %v1578 = vmul.f32 %v1514, %v1322
        %v1579 = vmul.f32 %v1515, %v1323
        %v1580 = vmul.f32 %v1516, %v1324
        %v1581 = vmul.f32 %v1517, %v1325
        %v1582 = vmul.f32 %v1518, %v1326
        %v1583 = vmul.f32 %v1519, %v1327
        %v1584 = vmul.f32 %v1520, %v1328
        %v1585 = vmul.f32 %v1521, %v1329
        %v1586 = vmul.f32 %v1522, %v1330
        %v1587 = vmul.f32 %v1523, %v1331
        %v1588 = vmul.f32 %v1524, %v1332
        %v1589 = vmul.f32 %v1525, %v1333
        %v1590 = vmul.f32 %v1526, %v1334
        %v1591 = vmul.f32 %v1527, %v1335
        %v1592 = vmul.f32 %v1528, %v1336
        %v1593 = vadd.f32 %v1273, %v1529
        %v1594 = vadd.f32 %v1274, %v1530
        %v1595 = vadd.f32 %v1275, %v1531
        %v1596 = vadd.f32 %v1276, %v1532
        %v1597 = vadd.f32 %v1277, %v1533
        %v1598 = vadd.f32 %v1278, %v1534
        %v1599 = vadd.f32 %v1279, %v1535
        %v1600 = vadd.f32 %v1280, %v1536
        %v1601 = vadd.f32 %v1281, %v1537
        %v1602 = vadd.f32 %v1282, %v1538
        %v1603 = vadd.f32 %v1283, %v1539
        %v1604 = vadd.f32 %v1284, %v1540
        %v1605 = vadd.f32 %v1285, %v1541
        %v1606 = vadd.f32 %v1286, %v1542
        %v1607 = vadd.f32 %v1287, %v1543
        %v1608 = vadd.f32 %v1288, %v1544
        %v1609 = vadd.f32 %v1289, %v1545
        %v1610 = vadd.f32 %v1290, %v1546
        %v1611 = vadd.f32 %v1291, %v1547
        %v1612 = vadd.f32 %v1292, %v1548
        %v1613 = vadd.f32 %v1293, %v1549
        %v1614 = vadd.f32 %v1294, %v1550
        %v1615 = vadd.f32 %v1295, %v1551
        %v1616 = vadd.f32 %v1296, %v1552
        %v1617 = vadd.f32 %v1297, %v1553
        %v1618 = vadd.f32 %v1298, %v1554
        %v1619 = vadd.f32 %v1299, %v1555
        %v1620 = vadd.f32 %v1300, %v1556
        %v1621 = vadd.f32 %v1301, %v1557
        %v1622 = vadd.f32 %v1302, %v1558
        %v1623 = vadd.f32 %v1303, %v1559
        %v1624 = vadd.f32 %v1304, %v1560
        %v1625 = vadd.f32 %v1305, %v1561
        %v1626 = vadd.f32 %v1306, %v1562
        %v1627 = vadd.f32 %v1307, %v1563
        %v1628 = vadd.f32 %v1308, %v1564
        %v1629 = vadd.f32 %v1309, %v1565
        %v1630 = vadd.f32 %v1310, %v1566
        %v1631 = vadd.f32 %v1311, %v1567
        %v1632 = vadd.f32 %v1312, %v1568
        %v1633 = vadd.f32 %v1313, %v1569
        %v1634 = vadd.f32 %v1314, %v1570
        %v1635 = vadd.f32 %v1315, %v1571
        %v1636 = vadd.f32 %v1316, %v1572
        %v1637 = vadd.f32 %v1317, %v1573
        %v1638 = vadd.f32 %v1318, %v1574
        %v1639 = vadd.f32 %v1319, %v1575
        %v1640 = vadd.f32 %v1320, %v1576
        %v1641 = vadd.f32 %v1321, %v1577
        %v1642 = vadd.f32 %v1322, %v1578
        %v1643 = vadd.f32 %v1323, %v1579
        %v1644 = vadd.f32 %v1324, %v1580
        %v1645 = vadd.f32 %v1325, %v1581
        %v1646 = vadd.f32 %v1326, %v1582
        %v1647 = vadd.f32 %v1327, %v1583
        %v1648 = vadd.f32 %v1328, %v1584
        %v1649 = vadd.f32 %v1329, %v1585
        %v1650 = vadd.f32 %v1330, %v1586
        %v1651 = vadd.f32 %v1331, %v1587
        %v1652 = vadd.f32 %v1332, %v1588
        %v1653 = vadd.f32 %v1333, %v1589
        %v1654 = vadd.f32 %v1334, %v1590
        %v1655 = vadd.f32 %v1335, %v1591
        %v1656 = vadd.f32 %v1336, %v1592
        %v1657 = vmul.f32 %v1593, 0.7978846
        %v1658 = vmul.f32 %v1594, 0.7978846
        %v1659 = vmul.f32 %v1595, 0.7978846
        %v1660 = vmul.f32 %v1596, 0.7978846
        %v1661 = vmul.f32 %v1597, 0.7978846
        %v1662 = vmul.f32 %v1598, 0.7978846
        %v1663 = vmul.f32 %v1599, 0.7978846
        %v1664 = vmul.f32 %v1600, 0.7978846
        %v1665 = vmul.f32 %v1601, 0.7978846
        %v1666 = vmul.f32 %v1602, 0.7978846
        %v1667 = vmul.f32 %v1603, 0.7978846
        %v1668 = vmul.f32 %v1604, 0.7978846
        %v1669 = vmul.f32 %v1605, 0.7978846
        %v1670 = vmul.f32 %v1606, 0.7978846
        %v1671 = vmul.f32 %v1607, 0.7978846
        %v1672 = vmul.f32 %v1608, 0.7978846
        %v1673 = vmul.f32 %v1609, 0.7978846
        %v1674 = vmul.f32 %v1610, 0.7978846
        %v1675 = vmul.f32 %v1611, 0.7978846
        %v1676 = vmul.f32 %v1612, 0.7978846
        %v1677 = vmul.f32 %v1613, 0.7978846
        %v1678 = vmul.f32 %v1614, 0.7978846
        %v1679 = vmul.f32 %v1615, 0.7978846
        %v1680 = vmul.f32 %v1616, 0.7978846
        %v1681 = vmul.f32 %v1617, 0.7978846
        %v1682 = vmul.f32 %v1618, 0.7978846
        %v1683 = vmul.f32 %v1619, 0.7978846
        %v1684 = vmul.f32 %v1620, 0.7978846
        %v1685 = vmul.f32 %v1621, 0.7978846
        %v1686 = vmul.f32 %v1622, 0.7978846
        %v1687 = vmul.f32 %v1623, 0.7978846
        %v1688 = vmul.f32 %v1624, 0.7978846
        %v1689 = vmul.f32 %v1625, 0.7978846
        %v1690 = vmul.f32 %v1626, 0.7978846
        %v1691 = vmul.f32 %v1627, 0.7978846
        %v1692 = vmul.f32 %v1628, 0.7978846
        %v1693 = vmul.f32 %v1629, 0.7978846
        %v1694 = vmul.f32 %v1630, 0.7978846
        %v1695 = vmul.f32 %v1631, 0.7978846
        %v1696 = vmul.f32 %v1632, 0.7978846
        %v1697 = vmul.f32 %v1633, 0.7978846
        %v1698 = vmul.f32 %v1634, 0.7978846
        %v1699 = vmul.f32 %v1635, 0.7978846
        %v1700 = vmul.f32 %v1636, 0.7978846
        %v1701 = vmul.f32 %v1637, 0.7978846
        %v1702 = vmul.f32 %v1638, 0.7978846
        %v1703 = vmul.f32 %v1639, 0.7978846
        %v1704 = vmul.f32 %v1640, 0.7978846
        %v1705 = vmul.f32 %v1641, 0.7978846
        %v1706 = vmul.f32 %v1642, 0.7978846
        %v1707 = vmul.f32 %v1643, 0.7978846
        %v1708 = vmul.f32 %v1644, 0.7978846
        %v1709 = vmul.f32 %v1645, 0.7978846
        %v1710 = vmul.f32 %v1646, 0.7978846
        %v1711 = vmul.f32 %v1647, 0.7978846
        %v1712 = vmul.f32 %v1648, 0.7978846
        %v1713 = vmul.f32 %v1649, 0.7978846
        %v1714 = vmul.f32 %v1650, 0.7978846
        %v1715 = vmul.f32 %v1651, 0.7978846
        %v1716 = vmul.f32 %v1652, 0.7978846
        %v1717 = vmul.f32 %v1653, 0.7978846
        %v1718 = vmul.f32 %v1654, 0.7978846
        %v1719 = vmul.f32 %v1655, 0.7978846
        %v1720 = vmul.f32 %v1656, 0.7978846
        %v1721 = vtanh.pop %v1657
        %v1722 = vtanh.pop %v1658
        %v1723 = vtanh.pop %v1659
        %v1724 = vtanh.pop %v1660
        %v1725 = vtanh.pop %v1661
        %v1726 = vtanh.pop %v1662
        %v1727 = vtanh.pop %v1663
        %v1728 = vtanh.pop %v1664
        %v1729 = vtanh.pop %v1665
        %v1730 = vtanh.pop %v1666
        %v1731 = vtanh.pop %v1667
        %v1732 = vtanh.pop %v1668
        %v1733 = vtanh.pop %v1669
        %v1734 = vtanh.pop %v1670
        %v1735 = vtanh.pop %v1671
        %v1736 = vtanh.pop %v1672
        %v1737 = vtanh.pop %v1673
        %v1738 = vtanh.pop %v1674
        %v1739 = vtanh.pop %v1675
        %v1740 = vtanh.pop %v1676
        %v1741 = vtanh.pop %v1677
        %v1742 = vtanh.pop %v1678
        %v1743 = vtanh.pop %v1679
        %v1744 = vtanh.pop %v1680
        %v1745 = vtanh.pop %v1681
        %v1746 = vtanh.pop %v1682
        %v1747 = vtanh.pop %v1683
        %v1748 = vtanh.pop %v1684
        %v1749 = vtanh.pop %v1685
        %v1750 = vtanh.pop %v1686
        %v1751 = vtanh.pop %v1687
        %v1752 = vtanh.pop %v1688
        %v1753 = vtanh.pop %v1689
        %v1754 = vtanh.pop %v1690
        %v1755 = vtanh.pop %v1691
        %v1756 = vtanh.pop %v1692
        %v1757 = vtanh.pop %v1693
        %v1758 = vtanh.pop %v1694
        %v1759 = vtanh.pop %v1695
        %v1760 = vtanh.pop %v1696
        %v1761 = vtanh.pop %v1697
        %v1762 = vtanh.pop %v1698
        %v1763 = vtanh.pop %v1699
        %v1764 = vtanh.pop %v1700
        %v1765 = vtanh.pop %v1701
        %v1766 = vtanh.pop %v1702
        %v1767 = vtanh.pop %v1703
        %v1768 = vtanh.pop %v1704
        %v1769 = vtanh.pop %v1705
        %v1770 = vtanh.pop %v1706
        %v1771 = vtanh.pop %v1707
        %v1772 = vtanh.pop %v1708
        %v1773 = vtanh.pop %v1709
        %v1774 = vtanh.pop %v1710
        %v1775 = vtanh.pop %v1711
        %v1776 = vtanh.pop %v1712
        %v1777 = vtanh.pop %v1713
        %v1778 = vtanh.pop %v1714
        %v1779 = vtanh.pop %v1715
        %v1780 = vtanh.pop %v1716
        %v1781 = vtanh.pop %v1717
        %v1782 = vtanh.pop %v1718
        %v1783 = vtanh.pop %v1719
        %v1784 = vtanh.pop %v1720
        %v1785 = vadd.f32 %v1721, 1.0
        %v1786 = vadd.f32 %v1722, 1.0
        %v1787 = vadd.f32 %v1723, 1.0
        %v1788 = vadd.f32 %v1724, 1.0
        %v1789 = vadd.f32 %v1725, 1.0
        %v1790 = vadd.f32 %v1726, 1.0
        %v1791 = vadd.f32 %v1727, 1.0
        %v1792 = vadd.f32 %v1728, 1.0
        %v1793 = vadd.f32 %v1729, 1.0
        %v1794 = vadd.f32 %v1730, 1.0
        %v1795 = vadd.f32 %v1731, 1.0
        %v1796 = vadd.f32 %v1732, 1.0
        %v1797 = vadd.f32 %v1733, 1.0
        %v1798 = vadd.f32 %v1734, 1.0
        %v1799 = vadd.f32 %v1735, 1.0
        %v1800 = vadd.f32 %v1736, 1.0
        %v1801 = vadd.f32 %v1737, 1.0
        %v1802 = vadd.f32 %v1738, 1.0
        %v1803 = vadd.f32 %v1739, 1.0
        %v1804 = vadd.f32 %v1740, 1.0
        %v1805 = vadd.f32 %v1741, 1.0
        %v1806 = vadd.f32 %v1742, 1.0
        %v1807 = vadd.f32 %v1743, 1.0
        %v1808 = vadd.f32 %v1744, 1.0
        %v1809 = vadd.f32 %v1745, 1.0
        %v1810 = vadd.f32 %v1746, 1.0
        %v1811 = vadd.f32 %v1747, 1.0
        %v1812 = vadd.f32 %v1748, 1.0
        %v1813 = vadd.f32 %v1749, 1.0
        %v1814 = vadd.f32 %v1750, 1.0
        %v1815 = vadd.f32 %v1751, 1.0
        %v1816 = vadd.f32 %v1752, 1.0
        %v1817 = vadd.f32 %v1753, 1.0
        %v1818 = vadd.f32 %v1754, 1.0
        %v1819 = vadd.f32 %v1755, 1.0
        %v1820 = vadd.f32 %v1756, 1.0
        %v1821 = vadd.f32 %v1757, 1.0
        %v1822 = vadd.f32 %v1758, 1.0
        %v1823 = vadd.f32 %v1759, 1.0
        %v1824 = vadd.f32 %v1760, 1.0
        %v1825 = vadd.f32 %v1761, 1.0
        %v1826 = vadd.f32 %v1762, 1.0
        %v1827 = vadd.f32 %v1763, 1.0
        %v1828 = vadd.f32 %v1764, 1.0
        %v1829 = vadd.f32 %v1765, 1.0
        %v1830 = vadd.f32 %v1766, 1.0
        %v1831 = vadd.f32 %v1767, 1.0
        %v1832 = vadd.f32 %v1768, 1.0
        %v1833 = vadd.f32 %v1769, 1.0
        %v1834 = vadd.f32 %v1770, 1.0
        %v1835 = vadd.f32 %v1771, 1.0
        %v1836 = vadd.f32 %v1772, 1.0
        %v1837 = vadd.f32 %v1773, 1.0
        %v1838 = vadd.f32 %v1774, 1.0
        %v1839 = vadd.f32 %v1775, 1.0
        %v1840 = vadd.f32 %v1776, 1.0
        %v1841 = vadd.f32 %v1777, 1.0
        %v1842 = vadd.f32 %v1778, 1.0
        %v1843 = vadd.f32 %v1779, 1.0
        %v1844 = vadd.f32 %v1780, 1.0
        %v1845 = vadd.f32 %v1781, 1.0
        %v1846 = vadd.f32 %v1782, 1.0
        %v1847 = vadd.f32 %v1783, 1.0
        %v1848 = vadd.f32 %v1784, 1.0
        %v1849 = vmul.f32 %v1337, %v1785
        %v1850 = vmul.f32 %v1338, %v1786
        %v1851 = vmul.f32 %v1339, %v1787
        %v1852 = vmul.f32 %v1340, %v1788
        %v1853 = vmul.f32 %v1341, %v1789
        %v1854 = vmul.f32 %v1342, %v1790
        %v1855 = vmul.f32 %v1343, %v1791
        %v1856 = vmul.f32 %v1344, %v1792
        %v1857 = vmul.f32 %v1345, %v1793
        %v1858 = vmul.f32 %v1346, %v1794
        %v1859 = vmul.f32 %v1347, %v1795
        %v1860 = vmul.f32 %v1348, %v1796
        %v1861 = vmul.f32 %v1349, %v1797
        %v1862 = vmul.f32 %v1350, %v1798
        %v1863 = vmul.f32 %v1351, %v1799
        %v1864 = vmul.f32 %v1352, %v1800
        %v1865 = vmul.f32 %v1353, %v1801
        %v1866 = vmul.f32 %v1354, %v1802
        %v1867 = vmul.f32 %v1355, %v1803
        %v1868 = vmul.f32 %v1356, %v1804
        %v1869 = vmul.f32 %v1357, %v1805
        %v1870 = vmul.f32 %v1358, %v1806
        %v1871 = vmul.f32 %v1359, %v1807
        %v1872 = vmul.f32 %v1360, %v1808
        %v1873 = vmul.f32 %v1361, %v1809
        %v1874 = vmul.f32 %v1362, %v1810
        %v1875 = vmul.f32 %v1363, %v1811
        %v1876 = vmul.f32 %v1364, %v1812
        %v1877 = vmul.f32 %v1365, %v1813
        %v1878 = vmul.f32 %v1366, %v1814
        %v1879 = vmul.f32 %v1367, %v1815
        %v1880 = vmul.f32 %v1368, %v1816
        %v1881 = vmul.f32 %v1369, %v1817
        %v1882 = vmul.f32 %v1370, %v1818
        %v1883 = vmul.f32 %v1371, %v1819
        %v1884 = vmul.f32 %v1372, %v1820
        %v1885 = vmul.f32 %v1373, %v1821
        %v1886 = vmul.f32 %v1374, %v1822
        %v1887 = vmul.f32 %v1375, %v1823
        %v1888 = vmul.f32 %v1376, %v1824
        %v1889 = vmul.f32 %v1377, %v1825
        %v1890 = vmul.f32 %v1378, %v1826
        %v1891 = vmul.f32 %v1379, %v1827
        %v1892 = vmul.f32 %v1380, %v1828
        %v1893 = vmul.f32 %v1381, %v1829
        %v1894 = vmul.f32 %v1382, %v1830
        %v1895 = vmul.f32 %v1383, %v1831
        %v1896 = vmul.f32 %v1384, %v1832
        %v1897 = vmul.f32 %v1385, %v1833
        %v1898 = vmul.f32 %v1386, %v1834
        %v1899 = vmul.f32 %v1387, %v1835
        %v1900 = vmul.f32 %v1388, %v1836
        %v1901 = vmul.f32 %v1389, %v1837
        %v1902 = vmul.f32 %v1390, %v1838
        %v1903 = vmul.f32 %v1391, %v1839
        %v1904 = vmul.f32 %v1392, %v1840
        %v1905 = vmul.f32 %v1393, %v1841
        %v1906 = vmul.f32 %v1394, %v1842
        %v1907 = vmul.f32 %v1395, %v1843
        %v1908 = vmul.f32 %v1396, %v1844
        %v1909 = vmul.f32 %v1397, %v1845
        %v1910 = vmul.f32 %v1398, %v1846
        %v1911 = vmul.f32 %v1399, %v1847
        %v1912 = vmul.f32 %v1400, %v1848
        %v1913 = vld [vmem:[%s4 + $0x1] sm:$0x1]
        %v1914 = vld [vmem:[%s4 + $0x2] sm:$0x1]
        %1915 = vadd.xlane.f32.xlu0 %v1849
        %v1916 = vpop.xlane.xlu0 %1915
        %1917 = vadd.xlane.f32.xlu0 %v1850
        %v1918 = vpop.xlane.xlu0 %1917
        %1919 = vadd.xlane.f32.xlu0 %v1851
        %v1920 = vpop.xlane.xlu0 %1919
        %1921 = vadd.xlane.f32.xlu0 %v1852
        %v1922 = vpop.xlane.xlu0 %1921
        %1923 = vadd.xlane.f32.xlu0 %v1853
        %v1924 = vpop.xlane.xlu0 %1923
        %1925 = vadd.xlane.f32.xlu0 %v1854
        %v1926 = vpop.xlane.xlu0 %1925
        %1927 = vadd.xlane.f32.xlu0 %v1855
        %v1928 = vpop.xlane.xlu0 %1927
        %1929 = vadd.xlane.f32.xlu0 %v1856
        %v1930 = vpop.xlane.xlu0 %1929
        %1931 = vadd.xlane.f32.xlu0 %v1857
        %v1932 = vpop.xlane.xlu0 %1931
        %1933 = vadd.xlane.f32.xlu0 %v1858
        %v1934 = vpop.xlane.xlu0 %1933
        %1935 = vadd.xlane.f32.xlu0 %v1859
        %v1936 = vpop.xlane.xlu0 %1935
        %1937 = vadd.xlane.f32.xlu0 %v1860
        %v1938 = vpop.xlane.xlu0 %1937
        %1939 = vadd.xlane.f32.xlu0 %v1861
        %v1940 = vpop.xlane.xlu0 %1939
        %1941 = vadd.xlane.f32.xlu0 %v1862
        %v1942 = vpop.xlane.xlu0 %1941
        %1943 = vadd.xlane.f32.xlu0 %v1863
        %v1944 = vpop.xlane.xlu0 %1943
        %1945 = vadd.xlane.f32.xlu0 %v1864
        %v1946 = vpop.xlane.xlu0 %1945
        %1947 = vadd.xlane.f32.xlu0 %v1865
        %v1948 = vpop.xlane.xlu0 %1947
        %1949 = vadd.xlane.f32.xlu0 %v1866
        %v1950 = vpop.xlane.xlu0 %1949
        %1951 = vadd.xlane.f32.xlu0 %v1867
        %v1952 = vpop.xlane.xlu0 %1951
        %1953 = vadd.xlane.f32.xlu0 %v1868
        %v1954 = vpop.xlane.xlu0 %1953
        %1955 = vadd.xlane.f32.xlu0 %v1869
        %v1956 = vpop.xlane.xlu0 %1955
        %1957 = vadd.xlane.f32.xlu0 %v1870
        %v1958 = vpop.xlane.xlu0 %1957
        %1959 = vadd.xlane.f32.xlu0 %v1871
        %v1960 = vpop.xlane.xlu0 %1959
        %1961 = vadd.xlane.f32.xlu0 %v1872
        %v1962 = vpop.xlane.xlu0 %1961
        %1963 = vadd.xlane.f32.xlu0 %v1873
        %v1964 = vpop.xlane.xlu0 %1963
        %1965 = vadd.xlane.f32.xlu0 %v1874
        %v1966 = vpop.xlane.xlu0 %1965
        %1967 = vadd.xlane.f32.xlu0 %v1875
        %v1968 = vpop.xlane.xlu0 %1967
        %1969 = vadd.xlane.f32.xlu0 %v1876
        %v1970 = vpop.xlane.xlu0 %1969
        %1971 = vadd.xlane.f32.xlu0 %v1877
        %v1972 = vpop.xlane.xlu0 %1971
        %1973 = vadd.xlane.f32.xlu0 %v1878
        %v1974 = vpop.xlane.xlu0 %1973
        %1975 = vadd.xlane.f32.xlu0 %v1879
        %v1976 = vpop.xlane.xlu0 %1975
        %1977 = vadd.xlane.f32.xlu0 %v1880
        %v1978 = vpop.xlane.xlu0 %1977
        %1979 = vadd.xlane.f32.xlu0 %v1881
        %v1980 = vpop.xlane.xlu0 %1979
        %1981 = vadd.xlane.f32.xlu0 %v1882
        %v1982 = vpop.xlane.xlu0 %1981
        %1983 = vadd.xlane.f32.xlu0 %v1883
        %v1984 = vpop.xlane.xlu0 %1983
        %1985 = vadd.xlane.f32.xlu0 %v1884
        %v1986 = vpop.xlane.xlu0 %1985
        %1987 = vadd.xlane.f32.xlu0 %v1885
        %v1988 = vpop.xlane.xlu0 %1987
        %1989 = vadd.xlane.f32.xlu0 %v1886
        %v1990 = vpop.xlane.xlu0 %1989
        %1991 = vadd.xlane.f32.xlu0 %v1887
        %v1992 = vpop.xlane.xlu0 %1991
        %1993 = vadd.xlane.f32.xlu0 %v1888
        %v1994 = vpop.xlane.xlu0 %1993
        %1995 = vadd.xlane.f32.xlu0 %v1889
        %v1996 = vpop.xlane.xlu0 %1995
        %1997 = vadd.xlane.f32.xlu0 %v1890
        %v1998 = vpop.xlane.xlu0 %1997
        %1999 = vadd.xlane.f32.xlu0 %v1891
        %v2000 = vpop.xlane.xlu0 %1999
        %2001 = vadd.xlane.f32.xlu0 %v1892
        %v2002 = vpop.xlane.xlu0 %2001
        %2003 = vadd.xlane.f32.xlu0 %v1893
        %v2004 = vpop.xlane.xlu0 %2003
        %2005 = vadd.xlane.f32.xlu0 %v1894
        %v2006 = vpop.xlane.xlu0 %2005
        %2007 = vadd.xlane.f32.xlu0 %v1895
        %v2008 = vpop.xlane.xlu0 %2007
        %2009 = vadd.xlane.f32.xlu0 %v1896
        %v2010 = vpop.xlane.xlu0 %2009
        %2011 = vadd.xlane.f32.xlu0 %v1897
        %v2012 = vpop.xlane.xlu0 %2011
        %2013 = vadd.xlane.f32.xlu0 %v1898
        %v2014 = vpop.xlane.xlu0 %2013
        %2015 = vadd.xlane.f32.xlu0 %v1899
        %v2016 = vpop.xlane.xlu0 %2015
        %2017 = vadd.xlane.f32.xlu0 %v1900
        %v2018 = vpop.xlane.xlu0 %2017
        %2019 = vadd.xlane.f32.xlu0 %v1901
        %v2020 = vpop.xlane.xlu0 %2019
        %2021 = vadd.xlane.f32.xlu0 %v1902
        %v2022 = vpop.xlane.xlu0 %2021
        %2023 = vadd.xlane.f32.xlu0 %v1903
        %v2024 = vpop.xlane.xlu0 %2023
        %2025 = vadd.xlane.f32.xlu0 %v1904
        %v2026 = vpop.xlane.xlu0 %2025
        %2027 = vadd.xlane.f32.xlu0 %v1905
        %v2028 = vpop.xlane.xlu0 %2027
        %2029 = vadd.xlane.f32.xlu0 %v1906
        %v2030 = vpop.xlane.xlu0 %2029
        %2031 = vadd.xlane.f32.xlu0 %v1907
        %v2032 = vpop.xlane.xlu0 %2031
        %2033 = vadd.xlane.f32.xlu0 %v1908
        %v2034 = vpop.xlane.xlu0 %2033
        %2035 = vadd.xlane.f32.xlu0 %v1909
        %v2036 = vpop.xlane.xlu0 %2035
        %2037 = vadd.xlane.f32.xlu0 %v1910
        %v2038 = vpop.xlane.xlu0 %2037
        %2039 = vadd.xlane.f32.xlu0 %v1911
        %v2040 = vpop.xlane.xlu0 %2039
        %2041 = vadd.xlane.f32.xlu0 %v1912
        %v2042 = vpop.xlane.xlu0 %2041
        %v2043 = vrcp.pop 128.0
        %v2044 = vmul.f32 %v1916, %v2043
        %v2045 = vmul.f32 %v1918, %v2043
        %v2046 = vmul.f32 %v1920, %v2043
        %v2047 = vmul.f32 %v1922, %v2043
        %v2048 = vmul.f32 %v1924, %v2043
        %v2049 = vmul.f32 %v1926, %v2043
        %v2050 = vmul.f32 %v1928, %v2043
        %v2051 = vmul.f32 %v1930, %v2043
        %v2052 = vmul.f32 %v1932, %v2043
        %v2053 = vmul.f32 %v1934, %v2043
        %v2054 = vmul.f32 %v1936, %v2043
        %v2055 = vmul.f32 %v1938, %v2043
        %v2056 = vmul.f32 %v1940, %v2043
        %v2057 = vmul.f32 %v1942, %v2043
        %v2058 = vmul.f32 %v1944, %v2043
        %v2059 = vmul.f32 %v1946, %v2043
        %v2060 = vmul.f32 %v1948, %v2043
        %v2061 = vmul.f32 %v1950, %v2043
        %v2062 = vmul.f32 %v1952, %v2043
        %v2063 = vmul.f32 %v1954, %v2043
        %v2064 = vmul.f32 %v1956, %v2043
        %v2065 = vmul.f32 %v1958, %v2043
        %v2066 = vmul.f32 %v1960, %v2043
        %v2067 = vmul.f32 %v1962, %v2043
        %v2068 = vmul.f32 %v1964, %v2043
        %v2069 = vmul.f32 %v1966, %v2043
        %v2070 = vmul.f32 %v1968, %v2043
        %v2071 = vmul.f32 %v1970, %v2043
        %v2072 = vmul.f32 %v1972, %v2043
        %v2073 = vmul.f32 %v1974, %v2043
        %v2074 = vmul.f32 %v1976, %v2043
        %v2075 = vmul.f32 %v1978, %v2043
        %v2076 = vmul.f32 %v1980, %v2043
        %v2077 = vmul.f32 %v1982, %v2043
        %v2078 = vmul.f32 %v1984, %v2043
        %v2079 = vmul.f32 %v1986, %v2043
        %v2080 = vmul.f32 %v1988, %v2043
        %v2081 = vmul.f32 %v1990, %v2043
        %v2082 = vmul.f32 %v1992, %v2043
        %v2083 = vmul.f32 %v1994, %v2043
        %v2084 = vmul.f32 %v1996, %v2043
        %v2085 = vmul.f32 %v1998, %v2043
        %v2086 = vmul.f32 %v2000, %v2043
        %v2087 = vmul.f32 %v2002, %v2043
        %v2088 = vmul.f32 %v2004, %v2043
        %v2089 = vmul.f32 %v2006, %v2043
        %v2090 = vmul.f32 %v2008, %v2043
        %v2091 = vmul.f32 %v2010, %v2043
        %v2092 = vmul.f32 %v2012, %v2043
        %v2093 = vmul.f32 %v2014, %v2043
        %v2094 = vmul.f32 %v2016, %v2043
        %v2095 = vmul.f32 %v2018, %v2043
        %v2096 = vmul.f32 %v2020, %v2043
        %v2097 = vmul.f32 %v2022, %v2043
        %v2098 = vmul.f32 %v2024, %v2043
        %v2099 = vmul.f32 %v2026, %v2043
        %v2100 = vmul.f32 %v2028, %v2043
        %v2101 = vmul.f32 %v2030, %v2043
        %v2102 = vmul.f32 %v2032, %v2043
        %v2103 = vmul.f32 %v2034, %v2043
        %v2104 = vmul.f32 %v2036, %v2043
        %v2105 = vmul.f32 %v2038, %v2043
        %v2106 = vmul.f32 %v2040, %v2043
        %v2107 = vmul.f32 %v2042, %v2043
        %v2108 = vsub.f32 %v1849, %v2044
        %v2109 = vsub.f32 %v1850, %v2045
        %v2110 = vsub.f32 %v1851, %v2046
        %v2111 = vsub.f32 %v1852, %v2047
        %v2112 = vsub.f32 %v1853, %v2048
        %v2113 = vsub.f32 %v1854, %v2049
        %v2114 = vsub.f32 %v1855, %v2050
        %v2115 = vsub.f32 %v1856, %v2051
        %v2116 = vsub.f32 %v1857, %v2052
        %v2117 = vsub.f32 %v1858, %v2053
        %v2118 = vsub.f32 %v1859, %v2054
        %v2119 = vsub.f32 %v1860, %v2055
        %v2120 = vsub.f32 %v1861, %v2056
        %v2121 = vsub.f32 %v1862, %v2057
        %v2122 = vsub.f32 %v1863, %v2058
        %v2123 = vsub.f32 %v1864, %v2059
        %v2124 = vsub.f32 %v1865, %v2060
        %v2125 = vsub.f32 %v1866, %v2061
        %v2126 = vsub.f32 %v1867, %v2062
        %v2127 = vsub.f32 %v1868, %v2063
        %v2128 = vsub.f32 %v1869, %v2064
        %v2129 = vsub.f32 %v1870, %v2065
        %v2130 = vsub.f32 %v1871, %v2066
        %v2131 = vsub.f32 %v1872, %v2067
        %v2132 = vsub.f32 %v1873, %v2068
        %v2133 = vsub.f32 %v1874, %v2069
        %v2134 = vsub.f32 %v1875, %v2070
        %v2135 = vsub.f32 %v1876, %v2071
        %v2136 = vsub.f32 %v1877, %v2072
        %v2137 = vsub.f32 %v1878, %v2073
        %v2138 = vsub.f32 %v1879, %v2074
        %v2139 = vsub.f32 %v1880, %v2075
        %v2140 = vsub.f32 %v1881, %v2076
        %v2141 = vsub.f32 %v1882, %v2077
        %v2142 = vsub.f32 %v1883, %v2078
        %v2143 = vsub.f32 %v1884, %v2079
        %v2144 = vsub.f32 %v1885, %v2080
        %v2145 = vsub.f32 %v1886, %v2081
        %v2146 = vsub.f32 %v1887, %v2082
        %v2147 = vsub.f32 %v1888, %v2083
        %v2148 = vsub.f32 %v1889, %v2084
        %v2149 = vsub.f32 %v1890, %v2085
        %v2150 = vsub.f32 %v1891, %v2086
        %v2151 = vsub.f32 %v1892, %v2087
        %v2152 = vsub.f32 %v1893, %v2088
        %v2153 = vsub.f32 %v1894, %v2089
        %v2154 = vsub.f32 %v1895, %v2090
        %v2155 = vsub.f32 %v1896, %v2091
        %v2156 = vsub.f32 %v1897, %v2092
        %v2157 = vsub.f32 %v1898, %v2093
        %v2158 = vsub.f32 %v1899, %v2094
        %v2159 = vsub.f32 %v1900, %v2095
        %v2160 = vsub.f32 %v1901, %v2096
        %v2161 = vsub.f32 %v1902, %v2097
        %v2162 = vsub.f32 %v1903, %v2098
        %v2163 = vsub.f32 %v1904, %v2099
        %v2164 = vsub.f32 %v1905, %v2100
        %v2165 = vsub.f32 %v1906, %v2101
        %v2166 = vsub.f32 %v1907, %v2102
        %v2167 = vsub.f32 %v1908, %v2103
        %v2168 = vsub.f32 %v1909, %v2104
        %v2169 = vsub.f32 %v1910, %v2105
        %v2170 = vsub.f32 %v1911, %v2106
        %v2171 = vsub.f32 %v1912, %v2107
        %v2172 = vmul.f32 %v2108, %v2108
        %v2173 = vmul.f32 %v2109, %v2109
        %v2174 = vmul.f32 %v2110, %v2110
        %v2175 = vmul.f32 %v2111, %v2111
        %v2176 = vmul.f32 %v2112, %v2112
        %v2177 = vmul.f32 %v2113, %v2113
        %v2178 = vmul.f32 %v2114, %v2114
        %v2179 = vmul.f32 %v2115, %v2115
        %v2180 = vmul.f32 %v2116, %v2116
        %v2181 = vmul.f32 %v2117, %v2117
        %v2182 = vmul.f32 %v2118, %v2118
        %v2183 = vmul.f32 %v2119, %v2119
        %v2184 = vmul.f32 %v2120, %v2120
        %v2185 = vmul.f32 %v2121, %v2121
        %v2186 = vmul.f32 %v2122, %v2122
        %v2187 = vmul.f32 %v2123, %v2123
        %v2188 = vmul.f32 %v2124, %v2124
        %v2189 = vmul.f32 %v2125, %v2125
        %v2190 = vmul.f32 %v2126, %v2126
        %v2191 = vmul.f32 %v2127, %v2127
        %v2192 = vmul.f32 %v2128, %v2128
        %v2193 = vmul.f32 %v2129, %v2129
        %v2194 = vmul.f32 %v2130, %v2130
        %v2195 = vmul.f32 %v2131, %v2131
        %v2196 = vmul.f32 %v2132, %v2132
        %v2197 = vmul.f32 %v2133, %v2133
        %v2198 = vmul.f32 %v2134, %v2134
        %v2199 = vmul.f32 %v2135, %v2135
        %v2200 = vmul.f32 %v2136, %v2136
        %v2201 = vmul.f32 %v2137, %v2137
        %v2202 = vmul.f32 %v2138, %v2138
        %v2203 = vmul.f32 %v2139, %v2139
        %v2204 = vmul.f32 %v2140, %v2140
        %v2205 = vmul.f32 %v2141, %v2141
        %v2206 = vmul.f32 %v2142, %v2142
        %v2207 = vmul.f32 %v2143, %v2143
        %v2208 = vmul.f32 %v2144, %v2144
        %v2209 = vmul.f32 %v2145, %v2145
        %v2210 = vmul.f32 %v2146, %v2146
        %v2211 = vmul.f32 %v2147, %v2147
        %v2212 = vmul.f32 %v2148, %v2148
        %v2213 = vmul.f32 %v2149, %v2149
        %v2214 = vmul.f32 %v2150, %v2150
        %v2215 = vmul.f32 %v2151, %v2151
        %v2216 = vmul.f32 %v2152, %v2152
        %v2217 = vmul.f32 %v2153, %v2153
        %v2218 = vmul.f32 %v2154, %v2154
        %v2219 = vmul.f32 %v2155, %v2155
        %v2220 = vmul.f32 %v2156, %v2156
        %v2221 = vmul.f32 %v2157, %v2157
        %v2222 = vmul.f32 %v2158, %v2158
        %v2223 = vmul.f32 %v2159, %v2159
        %v2224 = vmul.f32 %v2160, %v2160
        %v2225 = vmul.f32 %v2161, %v2161
        %v2226 = vmul.f32 %v2162, %v2162
        %v2227 = vmul.f32 %v2163, %v2163
        %v2228 = vmul.f32 %v2164, %v2164
        %v2229 = vmul.f32 %v2165, %v2165
        %v2230 = vmul.f32 %v2166, %v2166
        %v2231 = vmul.f32 %v2167, %v2167
        %v2232 = vmul.f32 %v2168, %v2168
        %v2233 = vmul.f32 %v2169, %v2169
        %v2234 = vmul.f32 %v2170, %v2170
        %v2235 = vmul.f32 %v2171, %v2171
        %2236 = vadd.xlane.f32.xlu0 %v2172
        %v2237 = vpop.xlane.xlu0 %2236
        %2238 = vadd.xlane.f32.xlu0 %v2173
        %v2239 = vpop.xlane.xlu0 %2238
        %2240 = vadd.xlane.f32.xlu0 %v2174
        %v2241 = vpop.xlane.xlu0 %2240
        %2242 = vadd.xlane.f32.xlu0 %v2175
        %v2243 = vpop.xlane.xlu0 %2242
        %2244 = vadd.xlane.f32.xlu0 %v2176
        %v2245 = vpop.xlane.xlu0 %2244
        %2246 = vadd.xlane.f32.xlu0 %v2177
        %v2247 = vpop.xlane.xlu0 %2246
        %2248 = vadd.xlane.f32.xlu0 %v2178
        %v2249 = vpop.xlane.xlu0 %2248
        %2250 = vadd.xlane.f32.xlu0 %v2179
        %v2251 = vpop.xlane.xlu0 %2250
        %2252 = vadd.xlane.f32.xlu0 %v2180
        %v2253 = vpop.xlane.xlu0 %2252
        %2254 = vadd.xlane.f32.xlu0 %v2181
        %v2255 = vpop.xlane.xlu0 %2254
        %2256 = vadd.xlane.f32.xlu0 %v2182
        %v2257 = vpop.xlane.xlu0 %2256
        %2258 = vadd.xlane.f32.xlu0 %v2183
        %v2259 = vpop.xlane.xlu0 %2258
        %2260 = vadd.xlane.f32.xlu0 %v2184
        %v2261 = vpop.xlane.xlu0 %2260
        %2262 = vadd.xlane.f32.xlu0 %v2185
        %v2263 = vpop.xlane.xlu0 %2262
        %2264 = vadd.xlane.f32.xlu0 %v2186
        %v2265 = vpop.xlane.xlu0 %2264
        %2266 = vadd.xlane.f32.xlu0 %v2187
        %v2267 = vpop.xlane.xlu0 %2266
        %2268 = vadd.xlane.f32.xlu0 %v2188
        %v2269 = vpop.xlane.xlu0 %2268
        %2270 = vadd.xlane.f32.xlu0 %v2189
        %v2271 = vpop.xlane.xlu0 %2270
        %2272 = vadd.xlane.f32.xlu0 %v2190
        %v2273 = vpop.xlane.xlu0 %2272
        %2274 = vadd.xlane.f32.xlu0 %v2191
        %v2275 = vpop.xlane.xlu0 %2274
        %2276 = vadd.xlane.f32.xlu0 %v2192
        %v2277 = vpop.xlane.xlu0 %2276
        %2278 = vadd.xlane.f32.xlu0 %v2193
        %v2279 = vpop.xlane.xlu0 %2278
        %2280 = vadd.xlane.f32.xlu0 %v2194
        %v2281 = vpop.xlane.xlu0 %2280
        %2282 = vadd.xlane.f32.xlu0 %v2195
        %v2283 = vpop.xlane.xlu0 %2282
        %2284 = vadd.xlane.f32.xlu0 %v2196
        %v2285 = vpop.xlane.xlu0 %2284
        %2286 = vadd.xlane.f32.xlu0 %v2197
        %v2287 = vpop.xlane.xlu0 %2286
        %2288 = vadd.xlane.f32.xlu0 %v2198
        %v2289 = vpop.xlane.xlu0 %2288
        %2290 = vadd.xlane.f32.xlu0 %v2199
        %v2291 = vpop.xlane.xlu0 %2290
        %2292 = vadd.xlane.f32.xlu0 %v2200
        %v2293 = vpop.xlane.xlu0 %2292
        %2294 = vadd.xlane.f32.xlu0 %v2201
        %v2295 = vpop.xlane.xlu0 %2294
        %2296 = vadd.xlane.f32.xlu0 %v2202
        %v2297 = vpop.xlane.xlu0 %2296
        %2298 = vadd.xlane.f32.xlu0 %v2203
        %v2299 = vpop.xlane.xlu0 %2298
        %2300 = vadd.xlane.f32.xlu0 %v2204
        %v2301 = vpop.xlane.xlu0 %2300
        %2302 = vadd.xlane.f32.xlu0 %v2205
        %v2303 = vpop.xlane.xlu0 %2302
        %2304 = vadd.xlane.f32.xlu0 %v2206
        %v2305 = vpop.xlane.xlu0 %2304
        %2306 = vadd.xlane.f32.xlu0 %v2207
        %v2307 = vpop.xlane.xlu0 %2306
        %2308 = vadd.xlane.f32.xlu0 %v2208
        %v2309 = vpop.xlane.xlu0 %2308
        %2310 = vadd.xlane.f32.xlu0 %v2209
        %v2311 = vpop.xlane.xlu0 %2310
        %2312 = vadd.xlane.f32.xlu0 %v2210
        %v2313 = vpop.xlane.xlu0 %2312
        %2314 = vadd.xlane.f32.xlu0 %v2211
        %v2315 = vpop.xlane.xlu0 %2314
        %2316 = vadd.xlane.f32.xlu0 %v2212
        %v2317 = vpop.xlane.xlu0 %2316
        %2318 = vadd.xlane.f32.xlu0 %v2213
        %v2319 = vpop.xlane.xlu0 %2318
        %2320 = vadd.xlane.f32.xlu0 %v2214
        %v2321 = vpop.xlane.xlu0 %2320
        %2322 = vadd.xlane.f32.xlu0 %v2215
        %v2323 = vpop.xlane.xlu0 %2322
        %2324 = vadd.xlane.f32.xlu0 %v2216
        %v2325 = vpop.xlane.xlu0 %2324
        %2326 = vadd.xlane.f32.xlu0 %v2217
        %v2327 = vpop.xlane.xlu0 %2326
        %2328 = vadd.xlane.f32.xlu0 %v2218
        %v2329 = vpop.xlane.xlu0 %2328
        %2330 = vadd.xlane.f32.xlu0 %v2219
        %v2331 = vpop.xlane.xlu0 %2330
        %2332 = vadd.xlane.f32.xlu0 %v2220
        %v2333 = vpop.xlane.xlu0 %2332
        %2334 = vadd.xlane.f32.xlu0 %v2221
        %v2335 = vpop.xlane.xlu0 %2334
        %2336 = vadd.xlane.f32.xlu0 %v2222
        %v2337 = vpop.xlane.xlu0 %2336
        %2338 = vadd.xlane.f32.xlu0 %v2223
        %v2339 = vpop.xlane.xlu0 %2338
        %2340 = vadd.xlane.f32.xlu0 %v2224
        %v2341 = vpop.xlane.xlu0 %2340
        %2342 = vadd.xlane.f32.xlu0 %v2225
        %v2343 = vpop.xlane.xlu0 %2342
        %2344 = vadd.xlane.f32.xlu0 %v2226
        %v2345 = vpop.xlane.xlu0 %2344
        %2346 = vadd.xlane.f32.xlu0 %v2227
        %v2347 = vpop.xlane.xlu0 %2346
        %2348 = vadd.xlane.f32.xlu0 %v2228
        %v2349 = vpop.xlane.xlu0 %2348
        %2350 = vadd.xlane.f32.xlu0 %v2229
        %v2351 = vpop.xlane.xlu0 %2350
        %2352 = vadd.xlane.f32.xlu0 %v2230
        %v2353 = vpop.xlane.xlu0 %2352
        %2354 = vadd.xlane.f32.xlu0 %v2231
        %v2355 = vpop.xlane.xlu0 %2354
        %2356 = vadd.xlane.f32.xlu0 %v2232
        %v2357 = vpop.xlane.xlu0 %2356
        %2358 = vadd.xlane.f32.xlu0 %v2233
        %v2359 = vpop.xlane.xlu0 %2358
        %2360 = vadd.xlane.f32.xlu0 %v2234
        %v2361 = vpop.xlane.xlu0 %2360
        %2362 = vadd.xlane.f32.xlu0 %v2235
        %v2363 = vpop.xlane.xlu0 %2362
        %v2364 = vmul.f32 %v2237, %v2043
        %v2365 = vmul.f32 %v2239, %v2043
        %v2366 = vmul.f32 %v2241, %v2043
        %v2367 = vmul.f32 %v2243, %v2043
        %v2368 = vmul.f32 %v2245, %v2043
        %v2369 = vmul.f32 %v2247, %v2043
        %v2370 = vmul.f32 %v2249, %v2043
        %v2371 = vmul.f32 %v2251, %v2043
        %v2372 = vmul.f32 %v2253, %v2043
        %v2373 = vmul.f32 %v2255, %v2043
        %v2374 = vmul.f32 %v2257, %v2043
        %v2375 = vmul.f32 %v2259, %v2043
        %v2376 = vmul.f32 %v2261, %v2043
        %v2377 = vmul.f32 %v2263, %v2043
        %v2378 = vmul.f32 %v2265, %v2043
        %v2379 = vmul.f32 %v2267, %v2043
        %v2380 = vmul.f32 %v2269, %v2043
        %v2381 = vmul.f32 %v2271, %v2043
        %v2382 = vmul.f32 %v2273, %v2043
        %v2383 = vmul.f32 %v2275, %v2043
        %v2384 = vmul.f32 %v2277, %v2043
        %v2385 = vmul.f32 %v2279, %v2043
        %v2386 = vmul.f32 %v2281, %v2043
        %v2387 = vmul.f32 %v2283, %v2043
        %v2388 = vmul.f32 %v2285, %v2043
        %v2389 = vmul.f32 %v2287, %v2043
        %v2390 = vmul.f32 %v2289, %v2043
        %v2391 = vmul.f32 %v2291, %v2043
        %v2392 = vmul.f32 %v2293, %v2043
        %v2393 = vmul.f32 %v2295, %v2043
        %v2394 = vmul.f32 %v2297, %v2043
        %v2395 = vmul.f32 %v2299, %v2043
        %v2396 = vmul.f32 %v2301, %v2043
        %v2397 = vmul.f32 %v2303, %v2043
        %v2398 = vmul.f32 %v2305, %v2043
        %v2399 = vmul.f32 %v2307, %v2043
        %v2400 = vmul.f32 %v2309, %v2043
        %v2401 = vmul.f32 %v2311, %v2043
        %v2402 = vmul.f32 %v2313, %v2043
        %v2403 = vmul.f32 %v2315, %v2043
        %v2404 = vmul.f32 %v2317, %v2043
        %v2405 = vmul.f32 %v2319, %v2043
        %v2406 = vmul.f32 %v2321, %v2043
        %v2407 = vmul.f32 %v2323, %v2043
        %v2408 = vmul.f32 %v2325, %v2043
        %v2409 = vmul.f32 %v2327, %v2043
        %v2410 = vmul.f32 %v2329, %v2043
        %v2411 = vmul.f32 %v2331, %v2043
        %v2412 = vmul.f32 %v2333, %v2043
        %v2413 = vmul.f32 %v2335, %v2043
        %v2414 = vmul.f32 %v2337, %v2043
        %v2415 = vmul.f32 %v2339, %v2043
        %v2416 = vmul.f32 %v2341, %v2043
        %v2417 = vmul.f32 %v2343, %v2043
        %v2418 = vmul.f32 %v2345, %v2043
        %v2419 = vmul.f32 %v2347, %v2043
        %v2420 = vmul.f32 %v2349, %v2043
        %v2421 = vmul.f32 %v2351, %v2043
        %v2422 = vmul.f32 %v2353, %v2043
        %v2423 = vmul.f32 %v2355, %v2043
        %v2424 = vmul.f32 %v2357, %v2043
        %v2425 = vmul.f32 %v2359, %v2043
        %v2426 = vmul.f32 %v2361, %v2043
        %v2427 = vmul.f32 %v2363, %v2043
        %v2428 = vadd.f32 %v2364, 1e-05
        %v2429 = vadd.f32 %v2365, 1e-05
        %v2430 = vadd.f32 %v2366, 1e-05
        %v2431 = vadd.f32 %v2367, 1e-05
        %v2432 = vadd.f32 %v2368, 1e-05
        %v2433 = vadd.f32 %v2369, 1e-05
        %v2434 = vadd.f32 %v2370, 1e-05
        %v2435 = vadd.f32 %v2371, 1e-05
        %v2436 = vadd.f32 %v2372, 1e-05
        %v2437 = vadd.f32 %v2373, 1e-05
        %v2438 = vadd.f32 %v2374, 1e-05
        %v2439 = vadd.f32 %v2375, 1e-05
        %v2440 = vadd.f32 %v2376, 1e-05
        %v2441 = vadd.f32 %v2377, 1e-05
        %v2442 = vadd.f32 %v2378, 1e-05
        %v2443 = vadd.f32 %v2379, 1e-05
        %v2444 = vadd.f32 %v2380, 1e-05
        %v2445 = vadd.f32 %v2381, 1e-05
        %v2446 = vadd.f32 %v2382, 1e-05
        %v2447 = vadd.f32 %v2383, 1e-05
        %v2448 = vadd.f32 %v2384, 1e-05
        %v2449 = vadd.f32 %v2385, 1e-05
        %v2450 = vadd.f32 %v2386, 1e-05
        %v2451 = vadd.f32 %v2387, 1e-05
        %v2452 = vadd.f32 %v2388, 1e-05
        %v2453 = vadd.f32 %v2389, 1e-05
        %v2454 = vadd.f32 %v2390, 1e-05
        %v2455 = vadd.f32 %v2391, 1e-05
        %v2456 = vadd.f32 %v2392, 1e-05
        %v2457 = vadd.f32 %v2393, 1e-05
        %v2458 = vadd.f32 %v2394, 1e-05
        %v2459 = vadd.f32 %v2395, 1e-05
        %v2460 = vadd.f32 %v2396, 1e-05
        %v2461 = vadd.f32 %v2397, 1e-05
        %v2462 = vadd.f32 %v2398, 1e-05
        %v2463 = vadd.f32 %v2399, 1e-05
        %v2464 = vadd.f32 %v2400, 1e-05
        %v2465 = vadd.f32 %v2401, 1e-05
        %v2466 = vadd.f32 %v2402, 1e-05
        %v2467 = vadd.f32 %v2403, 1e-05
        %v2468 = vadd.f32 %v2404, 1e-05
        %v2469 = vadd.f32 %v2405, 1e-05
        %v2470 = vadd.f32 %v2406, 1e-05
        %v2471 = vadd.f32 %v2407, 1e-05
        %v2472 = vadd.f32 %v2408, 1e-05
        %v2473 = vadd.f32 %v2409, 1e-05
        %v2474 = vadd.f32 %v2410, 1e-05
        %v2475 = vadd.f32 %v2411, 1e-05
        %v2476 = vadd.f32 %v2412, 1e-05
        %v2477 = vadd.f32 %v2413, 1e-05
        %v2478 = vadd.f32 %v2414, 1e-05
        %v2479 = vadd.f32 %v2415, 1e-05
        %v2480 = vadd.f32 %v2416, 1e-05
        %v2481 = vadd.f32 %v2417, 1e-05
        %v2482 = vadd.f32 %v2418, 1e-05
        %v2483 = vadd.f32 %v2419, 1e-05
        %v2484 = vadd.f32 %v2420, 1e-05
        %v2485 = vadd.f32 %v2421, 1e-05
        %v2486 = vadd.f32 %v2422, 1e-05
        %v2487 = vadd.f32 %v2423, 1e-05
        %v2488 = vadd.f32 %v2424, 1e-05
        %v2489 = vadd.f32 %v2425, 1e-05
        %v2490 = vadd.f32 %v2426, 1e-05
        %v2491 = vadd.f32 %v2427, 1e-05
        %v2492 = vrsqrt.pop %v2428
        %v2493 = vrsqrt.pop %v2429
        %v2494 = vrsqrt.pop %v2430
        %v2495 = vrsqrt.pop %v2431
        %v2496 = vrsqrt.pop %v2432
        %v2497 = vrsqrt.pop %v2433
        %v2498 = vrsqrt.pop %v2434
        %v2499 = vrsqrt.pop %v2435
        %v2500 = vrsqrt.pop %v2436
        %v2501 = vrsqrt.pop %v2437
        %v2502 = vrsqrt.pop %v2438
        %v2503 = vrsqrt.pop %v2439
        %v2504 = vrsqrt.pop %v2440
        %v2505 = vrsqrt.pop %v2441
        %v2506 = vrsqrt.pop %v2442
        %v2507 = vrsqrt.pop %v2443
        %v2508 = vrsqrt.pop %v2444
        %v2509 = vrsqrt.pop %v2445
        %v2510 = vrsqrt.pop %v2446
        %v2511 = vrsqrt.pop %v2447
        %v2512 = vrsqrt.pop %v2448
        %v2513 = vrsqrt.pop %v2449
        %v2514 = vrsqrt.pop %v2450
        %v2515 = vrsqrt.pop %v2451
        %v2516 = vrsqrt.pop %v2452
        %v2517 = vrsqrt.pop %v2453
        %v2518 = vrsqrt.pop %v2454
        %v2519 = vrsqrt.pop %v2455
        %v2520 = vrsqrt.pop %v2456
        %v2521 = vrsqrt.pop %v2457
        %v2522 = vrsqrt.pop %v2458
        %v2523 = vrsqrt.pop %v2459
        %v2524 = vrsqrt.pop %v2460
        %v2525 = vrsqrt.pop %v2461
        %v2526 = vrsqrt.pop %v2462
        %v2527 = vrsqrt.pop %v2463
        %v2528 = vrsqrt.pop %v2464
        %v2529 = vrsqrt.pop %v2465
        %v2530 = vrsqrt.pop %v2466
        %v2531 = vrsqrt.pop %v2467
        %v2532 = vrsqrt.pop %v2468
        %v2533 = vrsqrt.pop %v2469
        %v2534 = vrsqrt.pop %v2470
        %v2535 = vrsqrt.pop %v2471
        %v2536 = vrsqrt.pop %v2472
        %v2537 = vrsqrt.pop %v2473
        %v2538 = vrsqrt.pop %v2474
        %v2539 = vrsqrt.pop %v2475
        %v2540 = vrsqrt.pop %v2476
        %v2541 = vrsqrt.pop %v2477
        %v2542 = vrsqrt.pop %v2478
        %v2543 = vrsqrt.pop %v2479
        %v2544 = vrsqrt.pop %v2480
        %v2545 = vrsqrt.pop %v2481
        %v2546 = vrsqrt.pop %v2482
        %v2547 = vrsqrt.pop %v2483
        %v2548 = vrsqrt.pop %v2484
        %v2549 = vrsqrt.pop %v2485
        %v2550 = vrsqrt.pop %v2486
        %v2551 = vrsqrt.pop %v2487
        %v2552 = vrsqrt.pop %v2488
        %v2553 = vrsqrt.pop %v2489
        %v2554 = vrsqrt.pop %v2490
        %v2555 = vrsqrt.pop %v2491
        %v2556 = vmul.f32 %v2108, %v2492
        %v2557 = vmul.f32 %v2109, %v2493
        %v2558 = vmul.f32 %v2110, %v2494
        %v2559 = vmul.f32 %v2111, %v2495
        %v2560 = vmul.f32 %v2112, %v2496
        %v2561 = vmul.f32 %v2113, %v2497
        %v2562 = vmul.f32 %v2114, %v2498
        %v2563 = vmul.f32 %v2115, %v2499
        %v2564 = vmul.f32 %v2116, %v2500
        %v2565 = vmul.f32 %v2117, %v2501
        %v2566 = vmul.f32 %v2118, %v2502
        %v2567 = vmul.f32 %v2119, %v2503
        %v2568 = vmul.f32 %v2120, %v2504
        %v2569 = vmul.f32 %v2121, %v2505
        %v2570 = vmul.f32 %v2122, %v2506
        %v2571 = vmul.f32 %v2123, %v2507
        %v2572 = vmul.f32 %v2124, %v2508
        %v2573 = vmul.f32 %v2125, %v2509
        %v2574 = vmul.f32 %v2126, %v2510
        %v2575 = vmul.f32 %v2127, %v2511
        %v2576 = vmul.f32 %v2128, %v2512
        %v2577 = vmul.f32 %v2129, %v2513
        %v2578 = vmul.f32 %v2130, %v2514
        %v2579 = vmul.f32 %v2131, %v2515
        %v2580 = vmul.f32 %v2132, %v2516
        %v2581 = vmul.f32 %v2133, %v2517
        %v2582 = vmul.f32 %v2134, %v2518
        %v2583 = vmul.f32 %v2135, %v2519
        %v2584 = vmul.f32 %v2136, %v2520
        %v2585 = vmul.f32 %v2137, %v2521
        %v2586 = vmul.f32 %v2138, %v2522
        %v2587 = vmul.f32 %v2139, %v2523
        %v2588 = vmul.f32 %v2140, %v2524
        %v2589 = vmul.f32 %v2141, %v2525
        %v2590 = vmul.f32 %v2142, %v2526
        %v2591 = vmul.f32 %v2143, %v2527
        %v2592 = vmul.f32 %v2144, %v2528
        %v2593 = vmul.f32 %v2145, %v2529
        %v2594 = vmul.f32 %v2146, %v2530
        %v2595 = vmul.f32 %v2147, %v2531
        %v2596 = vmul.f32 %v2148, %v2532
        %v2597 = vmul.f32 %v2149, %v2533
        %v2598 = vmul.f32 %v2150, %v2534
        %v2599 = vmul.f32 %v2151, %v2535
        %v2600 = vmul.f32 %v2152, %v2536
        %v2601 = vmul.f32 %v2153, %v2537
        %v2602 = vmul.f32 %v2154, %v2538
        %v2603 = vmul.f32 %v2155, %v2539
        %v2604 = vmul.f32 %v2156, %v2540
        %v2605 = vmul.f32 %v2157, %v2541
        %v2606 = vmul.f32 %v2158, %v2542
        %v2607 = vmul.f32 %v2159, %v2543
        %v2608 = vmul.f32 %v2160, %v2544
        %v2609 = vmul.f32 %v2161, %v2545
        %v2610 = vmul.f32 %v2162, %v2546
        %v2611 = vmul.f32 %v2163, %v2547
        %v2612 = vmul.f32 %v2164, %v2548
        %v2613 = vmul.f32 %v2165, %v2549
        %v2614 = vmul.f32 %v2166, %v2550
        %v2615 = vmul.f32 %v2167, %v2551
        %v2616 = vmul.f32 %v2168, %v2552
        %v2617 = vmul.f32 %v2169, %v2553
        %v2618 = vmul.f32 %v2170, %v2554
        %v2619 = vmul.f32 %v2171, %v2555
        %v2620 = vlaneseq
        %v2621 = vshrl.u32 %v2620, 7
        %v2622 = vsub.s32 0, %v2621
        %v2623 = vrot.slane %v1913, %v2622
        %v2624 = vmul.f32 %v2556, %v2623
        %v2625 = vmul.f32 %v2557, %v2623
        %v2626 = vmul.f32 %v2558, %v2623
        %v2627 = vmul.f32 %v2559, %v2623
        %v2628 = vmul.f32 %v2560, %v2623
        %v2629 = vmul.f32 %v2561, %v2623
        %v2630 = vmul.f32 %v2562, %v2623
        %v2631 = vmul.f32 %v2563, %v2623
        %v2632 = vmul.f32 %v2564, %v2623
        %v2633 = vmul.f32 %v2565, %v2623
        %v2634 = vmul.f32 %v2566, %v2623
        %v2635 = vmul.f32 %v2567, %v2623
        %v2636 = vmul.f32 %v2568, %v2623
        %v2637 = vmul.f32 %v2569, %v2623
        %v2638 = vmul.f32 %v2570, %v2623
        %v2639 = vmul.f32 %v2571, %v2623
        %v2640 = vmul.f32 %v2572, %v2623
        %v2641 = vmul.f32 %v2573, %v2623
        %v2642 = vmul.f32 %v2574, %v2623
        %v2643 = vmul.f32 %v2575, %v2623
        %v2644 = vmul.f32 %v2576, %v2623
        %v2645 = vmul.f32 %v2577, %v2623
        %v2646 = vmul.f32 %v2578, %v2623
        %v2647 = vmul.f32 %v2579, %v2623
        %v2648 = vmul.f32 %v2580, %v2623
        %v2649 = vmul.f32 %v2581, %v2623
        %v2650 = vmul.f32 %v2582, %v2623
        %v2651 = vmul.f32 %v2583, %v2623
        %v2652 = vmul.f32 %v2584, %v2623
        %v2653 = vmul.f32 %v2585, %v2623
        %v2654 = vmul.f32 %v2586, %v2623
        %v2655 = vmul.f32 %v2587, %v2623
        %v2656 = vmul.f32 %v2588, %v2623
        %v2657 = vmul.f32 %v2589, %v2623
        %v2658 = vmul.f32 %v2590, %v2623
        %v2659 = vmul.f32 %v2591, %v2623
        %v2660 = vmul.f32 %v2592, %v2623
        %v2661 = vmul.f32 %v2593, %v2623
        %v2662 = vmul.f32 %v2594, %v2623
        %v2663 = vmul.f32 %v2595, %v2623
        %v2664 = vmul.f32 %v2596, %v2623
        %v2665 = vmul.f32 %v2597, %v2623
        %v2666 = vmul.f32 %v2598, %v2623
        %v2667 = vmul.f32 %v2599, %v2623
        %v2668 = vmul.f32 %v2600, %v2623
        %v2669 = vmul.f32 %v2601, %v2623
        %v2670 = vmul.f32 %v2602, %v2623
        %v2671 = vmul.f32 %v2603, %v2623
        %v2672 = vmul.f32 %v2604, %v2623
        %v2673 = vmul.f32 %v2605, %v2623
        %v2674 = vmul.f32 %v2606, %v2623
        %v2675 = vmul.f32 %v2607, %v2623
        %v2676 = vmul.f32 %v2608, %v2623
        %v2677 = vmul.f32 %v2609, %v2623
        %v2678 = vmul.f32 %v2610, %v2623
        %v2679 = vmul.f32 %v2611, %v2623
        %v2680 = vmul.f32 %v2612, %v2623
        %v2681 = vmul.f32 %v2613, %v2623
        %v2682 = vmul.f32 %v2614, %v2623
        %v2683 = vmul.f32 %v2615, %v2623
        %v2684 = vmul.f32 %v2616, %v2623
        %v2685 = vmul.f32 %v2617, %v2623
        %v2686 = vmul.f32 %v2618, %v2623
        %v2687 = vmul.f32 %v2619, %v2623
        %v2688 = vlaneseq
        %v2689 = vshrl.u32 %v2688, 7
        %v2690 = vsub.s32 0, %v2689
        %v2691 = vrot.slane %v1914, %v2690
        %v2692 = vadd.f32 %v2624, %v2691
        %v2693 = vadd.f32 %v2625, %v2691
        %v2694 = vadd.f32 %v2626, %v2691
        %v2695 = vadd.f32 %v2627, %v2691
        %v2696 = vadd.f32 %v2628, %v2691
        %v2697 = vadd.f32 %v2629, %v2691
        %v2698 = vadd.f32 %v2630, %v2691
        %v2699 = vadd.f32 %v2631, %v2691
        %v2700 = vadd.f32 %v2632, %v2691
        %v2701 = vadd.f32 %v2633, %v2691
        %v2702 = vadd.f32 %v2634, %v2691
        %v2703 = vadd.f32 %v2635, %v2691
        %v2704 = vadd.f32 %v2636, %v2691
        %v2705 = vadd.f32 %v2637, %v2691
        %v2706 = vadd.f32 %v2638, %v2691
        %v2707 = vadd.f32 %v2639, %v2691
        %v2708 = vadd.f32 %v2640, %v2691
        %v2709 = vadd.f32 %v2641, %v2691
        %v2710 = vadd.f32 %v2642, %v2691
        %v2711 = vadd.f32 %v2643, %v2691
        %v2712 = vadd.f32 %v2644, %v2691
        %v2713 = vadd.f32 %v2645, %v2691
        %v2714 = vadd.f32 %v2646, %v2691
        %v2715 = vadd.f32 %v2647, %v2691
        %v2716 = vadd.f32 %v2648, %v2691
        %v2717 = vadd.f32 %v2649, %v2691
        %v2718 = vadd.f32 %v2650, %v2691
        %v2719 = vadd.f32 %v2651, %v2691
        %v2720 = vadd.f32 %v2652, %v2691
        %v2721 = vadd.f32 %v2653, %v2691
        %v2722 = vadd.f32 %v2654, %v2691
        %v2723 = vadd.f32 %v2655, %v2691
        %v2724 = vadd.f32 %v2656, %v2691
        %v2725 = vadd.f32 %v2657, %v2691
        %v2726 = vadd.f32 %v2658, %v2691
        %v2727 = vadd.f32 %v2659, %v2691
        %v2728 = vadd.f32 %v2660, %v2691
        %v2729 = vadd.f32 %v2661, %v2691
        %v2730 = vadd.f32 %v2662, %v2691
        %v2731 = vadd.f32 %v2663, %v2691
        %v2732 = vadd.f32 %v2664, %v2691
        %v2733 = vadd.f32 %v2665, %v2691
        %v2734 = vadd.f32 %v2666, %v2691
        %v2735 = vadd.f32 %v2667, %v2691
        %v2736 = vadd.f32 %v2668, %v2691
        %v2737 = vadd.f32 %v2669, %v2691
        %v2738 = vadd.f32 %v2670, %v2691
        %v2739 = vadd.f32 %v2671, %v2691
        %v2740 = vadd.f32 %v2672, %v2691
        %v2741 = vadd.f32 %v2673, %v2691
        %v2742 = vadd.f32 %v2674, %v2691
        %v2743 = vadd.f32 %v2675, %v2691
        %v2744 = vadd.f32 %v2676, %v2691
        %v2745 = vadd.f32 %v2677, %v2691
        %v2746 = vadd.f32 %v2678, %v2691
        %v2747 = vadd.f32 %v2679, %v2691
        %v2748 = vadd.f32 %v2680, %v2691
        %v2749 = vadd.f32 %v2681, %v2691
        %v2750 = vadd.f32 %v2682, %v2691
        %v2751 = vadd.f32 %v2683, %v2691
        %v2752 = vadd.f32 %v2684, %v2691
        %v2753 = vadd.f32 %v2685, %v2691
        %v2754 = vadd.f32 %v2686, %v2691
        %v2755 = vadd.f32 %v2687, %v2691
        %2756 = vst [vmem:[%s259] sm:$0xff] %v2692
        %2757 = vst [vmem:[%s259 + $0x8] sm:$0xff] %v2693
        %2758 = vst [vmem:[%s259 + $0x10] sm:$0xff] %v2694
        %2759 = vst [vmem:[%s259 + $0x18] sm:$0xff] %v2695
        %2760 = vst [vmem:[%s259 + $0x20] sm:$0xff] %v2696
        %2761 = vst [vmem:[%s259 + $0x28] sm:$0xff] %v2697
        %2762 = vst [vmem:[%s259 + $0x30] sm:$0xff] %v2698
        %2763 = vst [vmem:[%s259 + $0x38] sm:$0xff] %v2699
        %2764 = vst [vmem:[%s259 + $0x40] sm:$0xff] %v2700
        %2765 = vst [vmem:[%s259 + $0x48] sm:$0xff] %v2701
        %2766 = vst [vmem:[%s259 + $0x50] sm:$0xff] %v2702
        %2767 = vst [vmem:[%s259 + $0x58] sm:$0xff] %v2703
        %2768 = vst [vmem:[%s259 + $0x60] sm:$0xff] %v2704
        %2769 = vst [vmem:[%s259 + $0x68] sm:$0xff] %v2705
        %2770 = vst [vmem:[%s259 + $0x70] sm:$0xff] %v2706
        %2771 = vst [vmem:[%s259 + $0x78] sm:$0xff] %v2707
        %2772 = vst [vmem:[%s259 + $0x80] sm:$0xff] %v2708
        %2773 = vst [vmem:[%s259 + $0x88] sm:$0xff] %v2709
        %2774 = vst [vmem:[%s259 + $0x90] sm:$0xff] %v2710
        %2775 = vst [vmem:[%s259 + $0x98] sm:$0xff] %v2711
        %2776 = vst [vmem:[%s259 + $0xa0] sm:$0xff] %v2712
        %2777 = vst [vmem:[%s259 + $0xa8] sm:$0xff] %v2713
        %2778 = vst [vmem:[%s259 + $0xb0] sm:$0xff] %v2714
        %2779 = vst [vmem:[%s259 + $0xb8] sm:$0xff] %v2715
        %2780 = vst [vmem:[%s259 + $0xc0] sm:$0xff] %v2716
        %2781 = vst [vmem:[%s259 + $0xc8] sm:$0xff] %v2717
        %2782 = vst [vmem:[%s259 + $0xd0] sm:$0xff] %v2718
        %2783 = vst [vmem:[%s259 + $0xd8] sm:$0xff] %v2719
        %2784 = vst [vmem:[%s259 + $0xe0] sm:$0xff] %v2720
        %2785 = vst [vmem:[%s259 + $0xe8] sm:$0xff] %v2721
        %2786 = vst [vmem:[%s259 + $0xf0] sm:$0xff] %v2722
        %2787 = vst [vmem:[%s259 + $0xf8] sm:$0xff] %v2723
        %2788 = vst [vmem:[%s259 + $0x100] sm:$0xff] %v2724
        %2789 = vst [vmem:[%s259 + $0x108] sm:$0xff] %v2725
        %2790 = vst [vmem:[%s259 + $0x110] sm:$0xff] %v2726
        %2791 = vst [vmem:[%s259 + $0x118] sm:$0xff] %v2727
        %2792 = vst [vmem:[%s259 + $0x120] sm:$0xff] %v2728
        %2793 = vst [vmem:[%s259 + $0x128] sm:$0xff] %v2729
        %2794 = vst [vmem:[%s259 + $0x130] sm:$0xff] %v2730
        %2795 = vst [vmem:[%s259 + $0x138] sm:$0xff] %v2731
        %2796 = vst [vmem:[%s259 + $0x140] sm:$0xff] %v2732
        %2797 = vst [vmem:[%s259 + $0x148] sm:$0xff] %v2733
        %2798 = vst [vmem:[%s259 + $0x150] sm:$0xff] %v2734
        %2799 = vst [vmem:[%s259 + $0x158] sm:$0xff] %v2735
        %2800 = vst [vmem:[%s259 + $0x160] sm:$0xff] %v2736
        %2801 = vst [vmem:[%s259 + $0x168] sm:$0xff] %v2737
        %2802 = vst [vmem:[%s259 + $0x170] sm:$0xff] %v2738
        %2803 = vst [vmem:[%s259 + $0x178] sm:$0xff] %v2739
        %2804 = vst [vmem:[%s259 + $0x180] sm:$0xff] %v2740
        %2805 = vst [vmem:[%s259 + $0x188] sm:$0xff] %v2741
        %2806 = vst [vmem:[%s259 + $0x190] sm:$0xff] %v2742
        %2807 = vst [vmem:[%s259 + $0x198] sm:$0xff] %v2743
        %2808 = vst [vmem:[%s259 + $0x1a0] sm:$0xff] %v2744
        %2809 = vst [vmem:[%s259 + $0x1a8] sm:$0xff] %v2745
        %2810 = vst [vmem:[%s259 + $0x1b0] sm:$0xff] %v2746
        %2811 = vst [vmem:[%s259 + $0x1b8] sm:$0xff] %v2747
        %2812 = vst [vmem:[%s259 + $0x1c0] sm:$0xff] %v2748
        %2813 = vst [vmem:[%s259 + $0x1c8] sm:$0xff] %v2749
        %2814 = vst [vmem:[%s259 + $0x1d0] sm:$0xff] %v2750
        %2815 = vst [vmem:[%s259 + $0x1d8] sm:$0xff] %v2751
        %2816 = vst [vmem:[%s259 + $0x1e0] sm:$0xff] %v2752
        %2817 = vst [vmem:[%s259 + $0x1e8] sm:$0xff] %v2753
        %2818 = vst [vmem:[%s259 + $0x1f0] sm:$0xff] %v2754
        %2819 = vst [vmem:[%s259 + $0x1f8] sm:$0xff] %v2755
        %s2820 = sand.u32 %s145, 1
        %s2821 = scalar_lea.sflag [#allocation4], %s2820
        %s2822 = sand.u32 %s145, 1
        %s2823 = smul.addr %s2822, 512
        %s2824 = scalar_lea.vmem [#allocation5], %s2823
        // Predicated region
        $region45: #{tpu_custom_call.1} parent=39 // pred_check
          %p2825 = pneg %p155
        $region46: #{tpu_custom_call.1} parent=39 // pred_check_branch
          %2827 = sbr.rel (%p2825) target = $region48
        $region47: #{tpu_custom_call.1} parent=39 // pred_region
          %s2828 = smul.u32 64, %s22
          %s2830 = ssub.s32 8192, 8192
          %2831 = vsyncadd %s2821, %s2830
          %s2832 = smul.addr %s2828, 128
          %s2833 = scalar_lea.hbm %s5, %s2832
          %s2834 = sshll.u32 %s2824, 4
          %s2835 = int_to_ptr.vmem [resolvable:$true] %s2834
          %2840 = dma.vmem_to_hbm [thread:$0]  %s2835, 8192, %s2833, %s2821, 128, 128, 8
        $region48: #{tpu_custom_call.1} parent=39 // pred_fallthru
          _
      $region40: #{tpu_custom_call.1} parent=5 // pred_fallthru
        _
      %p2841 = scmp.le.s32.totalorder 2, %s17
      // Predicated region
      $region49: #{tpu_custom_call.1} parent=5 // pred_check
        %p2842 = pneg %p2841
      $region50: #{tpu_custom_call.1} parent=5 // pred_check_branch
        %2844 = sbr.rel (%p2842) target = $region52
      $region51: #{tpu_custom_call.1} parent=5 // pred_region
        %s2845 = ssub.s32 %s17, 2
        // Predicated region
        $region53: #{tpu_custom_call.1} parent=51 // pred_check
          %p2846 = pneg %p161
        $region54: #{tpu_custom_call.1} parent=51 // pred_check_branch
          %2848 = sbr.rel (%p2846) target = $region56
        $region55: #{tpu_custom_call.1} parent=51 // pred_region
          %s2849 = sand.u32 %s146, 1
          %s2850 = scalar_lea.sflag [#allocation4], %s2849
          %s2851 = sand.u32 %s146, 1
          %s2852 = smul.addr %s2851, 512
          %s2853 = scalar_lea.vmem [#allocation5], %s2852
          %2854 = dma.done %s2850, 8192
        $region56: #{tpu_custom_call.1} parent=51 // pred_fallthru
          _
      $region52: #{tpu_custom_call.1} parent=5 // pred_fallthru
        _
    $region6: #{tpu_custom_call.1} parent=1 // loop_footer
      %s21 = sadd.s32 1, %s17
    $region7: #{tpu_custom_call.1} parent=1 // loop_footer_branch
      %16 = sbr.rel target = $region3
    $region8: #{tpu_custom_call.1} parent=1 // loop_exit
      _
    %2855 = vsyncpa [#allocation3], 1
    %s2856 = scalar_lea.sflag [#allocation3], 1
    %2857 = vsyncpa %s2856, 1
    %2858 = vsyncpa [#allocation4], 1
    %s2859 = scalar_lea.sflag [#allocation4], 1
    %2860 = vsyncpa %s2859, 1

</llo_original>
